<compile_context>
chip_gen: v5e
topology: v5e:2x2
jax: 0.10.0
libtpu: 0.0.40
codegen_flags: <defaults>
</compile_context>

<pallas_src>
import functools
import math

import jax
import jax.numpy as jnp
from jax.experimental import pallas as pl
from jax.experimental.pallas import tpu as pltpu


def _range_fourier_kernel(x_ref, wr_ref, wi_ref, ws_ref, out_ref):
    # x_ref : (2, C, tn)  -> [0] real plane, [1] imag plane
    # w*_ref: (C, C)      -> wr, wi, ws = wr + wi (resident DFT matrices)
    # out   : (2, C, tn)  -> [0] angle, [1] magnitude
    xr = x_ref[0]
    xi = x_ref[1]
    cdt = wr_ref.dtype  # bf16 weights => bf16 MXU inputs; f32 accumulation either way
    # Gauss 3-multiplication complex matmul on the MXU.
    k1 = jnp.dot(ws_ref[...], xr.astype(cdt), preferred_element_type=jnp.float32)
    k2 = jnp.dot(wr_ref[...], (xi - xr).astype(cdt), preferred_element_type=jnp.float32)
    k3 = jnp.dot(wi_ref[...], (xr + xi).astype(cdt), preferred_element_type=jnp.float32)
    yr = k1 - k3            # = wr@xr - wi@xi
    yi = k1 + k2            # = wi@xr + wr@xi
    out_ref[0] = jnp.arctan2(yi, yr)
    out_ref[1] = jnp.sqrt(yr * yr + yi * yi)


def make_range_fourier_weights(channels: int, dtype=jnp.float32):
    """W[h, j] = exp(-i*2*pi*j*h/channels), returned as (wr, wi, wr+wi)."""
    idx = jnp.arange(channels, dtype=jnp.int32)
    # (j*h) mod C in exact int32 arithmetic -> phases in [0, 2*pi), avoiding
    # f32 rounding of the large j*h product at big C.
    k = (idx[:, None] * idx[None, :]) % channels
    phase = (2.0 * math.pi / channels) * k.astype(jnp.float32)
    wr = jnp.cos(phase)
    wi = -jnp.sin(phase)
    ws = wr + wi
    return wr.astype(dtype), wi.astype(dtype), ws.astype(dtype)


def _round_up(a: int, m: int) -> int:
    return ((a + m - 1) // m) * m


def _kernel_vmem_bytes(C: int, tn: int, w_bytes: int) -> int:
    plane = C * tn * 4                 # one (C, tn) f32 plane
    io = 2 * (2 * plane) * 2           # (2,C,tn) input + output, double-buffered
    wts = 3 * C * C * w_bytes * 2      # wr/wi/ws (constant index, double-buffered)
    tmp = 8 * plane                    # k1/k2/k3/yr/yi + temporaries headroom
    return io + wts + tmp


_VMEM_BUDGET = 44 * 1024 * 1024        # v7x-safe (64 MiB physical VMEM)


def _choose_tile(N: int, C: int, w_bytes: int, target_tn: int) -> int:
    n128 = _round_up(max(N, 1), 128)
    tn = max(128, _round_up(min(target_tn, n128), 128))
    while tn > 128 and _kernel_vmem_bytes(C, tn, w_bytes) > _VMEM_BUDGET:
        tn -= 128
    # Keep >= 2 grid steps when there is enough work so the single parallel
    # grid axis can shard across both v7x TensorCores.
    if n128 >= 256 and pl.cdiv(N, tn) < 2:
        tn = max(128, _round_up(pl.cdiv(n128, 2), 128))
    return tn


@functools.partial(jax.jit, static_argnames=("target_tn",))
def range_fourier_net(x, wr, wi, ws, *, target_tn=1024):
    """x: (B, C, H, 2W) f32 with interleaved (re, im) pairs.
    Returns (B, C, H, 2W): out[..., :W] = angle(y), out[..., W:] = abs(y)."""
    B, C, H, W2 = x.shape
    W = W2 // 2
    N = B * H * W

    # Single HBM pass in: (B,C,H,2W) -> (B,C,H,W,2) [free] -> (2, C, B*H*W).
    x5 = x.reshape(B, C, H, W, 2)
    xt = jnp.transpose(x5, (4, 1, 0, 2, 3)).reshape(2, C, N)

    w_bytes = jnp.dtype(wr.dtype).itemsize
    tn = _choose_tile(N, C, w_bytes, target_tn)
    n_pad = _round_up(N, tn)
    if n_pad != N:
        xt = jnp.pad(xt, ((0, 0), (0, 0), (0, n_pad - N)))

    vmem_limit = max(32 * 1024 * 1024,
                     _kernel_vmem_bytes(C, tn, w_bytes) + 8 * 1024 * 1024)

    out = pl.pallas_call(
        _range_fourier_kernel,
        out_shape=jax.ShapeDtypeStruct((2, C, n_pad), jnp.float32),
        grid_spec=pltpu.PrefetchScalarGridSpec(
            num_scalar_prefetch=0,
            grid=(n_pad // tn,),
            in_specs=[
                pl.BlockSpec((2, C, tn), lambda i: (0, 0, i)),   # re/im planes tile
                pl.BlockSpec((C, C), lambda i: (0, 0)),          # wr (resident)
                pl.BlockSpec((C, C), lambda i: (0, 0)),          # wi (resident)
                pl.BlockSpec((C, C), lambda i: (0, 0)),          # ws = wr+wi (resident)
            ],
            out_specs=pl.BlockSpec((2, C, tn), lambda i: (0, 0, i)),
        ),
        compiler_params=pltpu.CompilerParams(
            dimension_semantics=("parallel",),
            vmem_limit_bytes=int(vmem_limit)),
    )(xt, wr, wi, ws)

    # Single HBM pass out: (2, C, N) -> (B, C, H, 2, W) -> (B, C, H, 2W),
    # which is exactly cat(angle, mag) along the last dim.
    out = out[:, :, :N].reshape(2, C, B, H, W)
    out = jnp.transpose(out, (2, 1, 3, 0, 4)).reshape(B, C, H, 2 * W)
    return out


def _reference(x, wr, wi):
    """Pure-JAX reference mirroring the PyTorch forward (f32)."""
    xr = x[..., 0::2]
    xi = x[..., 1::2]
    yr = jnp.einsum("oc,bchw->bohw", wr, xr) - jnp.einsum("oc,bchw->bohw", wi, xi)
    yi = jnp.einsum("oc,bchw->bohw", wr, xi) + jnp.einsum("oc,bchw->bohw", wi, xr)
    ang = jnp.arctan2(yi, yr)
    mag = jnp.sqrt(yr * yr + yi * yi)
    return jnp.concatenate([ang, mag], axis=-1)


def _check_close(out, ref, W, atol=2e-3, rtol=2e-3):
    ang_o, mag_o = out[..., :W], out[..., W:]
    ang_r, mag_r = ref[..., :W], ref[..., W:]
    assert jnp.allclose(mag_o, mag_r, atol=atol, rtol=rtol), (
        float(jnp.max(jnp.abs(mag_o - mag_r))))
    # Angle is 2*pi-periodic and ill-conditioned where |y| ~ 0: compare the
    # arc error |dtheta|*|y| against the same atol/rtol budget.
    d = jnp.abs(ang_o - ang_r)
    d = jnp.minimum(d, 2.0 * jnp.pi - d)
    assert jnp.all(d * mag_r <= atol + rtol * mag_r), (
        float(jnp.max(d * mag_r)))


if __name__ == "__main__":
    # Small shapes consistent with the module (the real module uses channels=512).
    cases = [
        (2, 128, 8, 16),   # multi-tile pixel axis (N = 256 -> grid of 2)
        (1, 64, 5, 6),     # ragged pixel count (N = 30) -> padded-tile path
    ]
    for (B, C, H, W) in cases:
        key = jax.random.PRNGKey(0)
        x = jax.random.normal(key, (B, C, H, 2 * W), dtype=jnp.float32)
        wr, wi, ws = make_range_fourier_weights(C)
        out = jax.block_until_ready(range_fourier_net(x, wr, wi, ws))
        assert out.shape == (B, C, H, 2 * W), out.shape
        ref = _reference(x, wr, wi)
        _check_close(out, ref, W)
    print("KERNEL_OK")
</pallas_src>

<mosaic_0001>
module attributes {stable_mosaic.version = 11 : i64} {
  func.func @_range_fourier_kernel(%arg0: i32, %arg1: memref<2x128x128xf32, #tpu.memory_space<vmem>>, %arg2: memref<128x128xf32, #tpu.memory_space<vmem>>, %arg3: memref<128x128xf32, #tpu.memory_space<vmem>>, %arg4: memref<128x128xf32, #tpu.memory_space<vmem>>, %arg5: memref<2x128x128xf32, #tpu.memory_space<vmem>>) attributes {dimension_semantics = [#tpu.dimension_semantics<parallel>], iteration_bounds = array<i64: 2>, scalar_prefetch = 0 : i64, scratch_operands = 0 : i64, tpu.core_type = #tpu.core_type<tc>, window_params = [{transform_indices = @transform_0, window_bounds = array<i64: 2, 128, 128>}, {pipeline_mode = #tpu.pipeline_mode<synchronous>, transform_indices = @transform_1, window_bounds = array<i64: 128, 128>}, {pipeline_mode = #tpu.pipeline_mode<synchronous>, transform_indices = @transform_2, window_bounds = array<i64: 128, 128>}, {pipeline_mode = #tpu.pipeline_mode<synchronous>, transform_indices = @transform_3, window_bounds = array<i64: 128, 128>}, {transform_indices = @transform_4, window_bounds = array<i64: 2, 128, 128>}]} {
    %c0 = arith.constant 0 : index
    %c0_0 = arith.constant 0 : index
    %c0_1 = arith.constant 0 : index
    %0 = vector.load %arg1[%c0, %c0_0, %c0_1] : memref<2x128x128xf32, #tpu.memory_space<vmem>>, vector<1x128x128xf32>
    %1 = vector.shape_cast %0 : vector<1x128x128xf32> to vector<128x128xf32>
    %c1 = arith.constant 1 : index
    %c0_2 = arith.constant 0 : index
    %c0_3 = arith.constant 0 : index
    %2 = vector.load %arg1[%c1, %c0_2, %c0_3] : memref<2x128x128xf32, #tpu.memory_space<vmem>>, vector<1x128x128xf32>
    %3 = vector.shape_cast %2 : vector<1x128x128xf32> to vector<128x128xf32>
    %c0_4 = arith.constant 0 : index
    %c0_5 = arith.constant 0 : index
    %4 = vector.load %arg4[%c0_4, %c0_5] : memref<128x128xf32, #tpu.memory_space<vmem>>, vector<128x128xf32>
    %cst = arith.constant dense<0.000000e+00> : vector<128x128xf32>
    %5 = tpu.matmul %4, %1, %cst {dimension_numbers = #tpu.dot_dimension_numbers<[1], [0], [0], [1], [0, 0, 1, 1], [], []>} : vector<128x128xf32>, vector<128x128xf32>, vector<128x128xf32> -> vector<128x128xf32>
    %c0_6 = arith.constant 0 : index
    %c0_7 = arith.constant 0 : index
    %6 = vector.load %arg2[%c0_6, %c0_7] : memref<128x128xf32, #tpu.memory_space<vmem>>, vector<128x128xf32>
    %7 = arith.subf %3, %1 : vector<128x128xf32>
    %cst_8 = arith.constant dense<0.000000e+00> : vector<128x128xf32>
    %8 = tpu.matmul %6, %7, %cst_8 {dimension_numbers = #tpu.dot_dimension_numbers<[1], [0], [0], [1], [0, 0, 1, 1], [], []>} : vector<128x128xf32>, vector<128x128xf32>, vector<128x128xf32> -> vector<128x128xf32>
    %c0_9 = arith.constant 0 : index
    %c0_10 = arith.constant 0 : index
    %9 = vector.load %arg3[%c0_9, %c0_10] : memref<128x128xf32, #tpu.memory_space<vmem>>, vector<128x128xf32>
    %10 = arith.addf %1, %3 : vector<128x128xf32>
    %cst_11 = arith.constant dense<0.000000e+00> : vector<128x128xf32>
    %11 = tpu.matmul %9, %10, %cst_11 {dimension_numbers = #tpu.dot_dimension_numbers<[1], [0], [0], [1], [0, 0, 1, 1], [], []>} : vector<128x128xf32>, vector<128x128xf32>, vector<128x128xf32> -> vector<128x128xf32>
    %12 = arith.subf %5, %11 : vector<128x128xf32>
    %13 = arith.addf %5, %8 : vector<128x128xf32>
    %14 = math.atan2 %13, %12 : vector<128x128xf32>
    %c0_12 = arith.constant 0 : index
    %c0_13 = arith.constant 0 : index
    %c0_14 = arith.constant 0 : index
    %15 = vector.load %arg5[%c0_12, %c0_13, %c0_14] : memref<2x128x128xf32, #tpu.memory_space<vmem>>, vector<1x128x128xf32>
    %16 = vector.shape_cast %15 : vector<1x128x128xf32> to vector<128x128xf32>
    %17 = vector.shape_cast %14 : vector<128x128xf32> to vector<1x128x128xf32>
    tpu.vector_store %arg5[%c0_12, %c0_13, %c0_14], %17 {strides = array<i32>} : memref<2x128x128xf32, #tpu.memory_space<vmem>>, vector<1x128x128xf32>,
    %18 = arith.mulf %12, %12 : vector<128x128xf32>
    %19 = arith.mulf %13, %13 : vector<128x128xf32>
    %20 = arith.addf %18, %19 : vector<128x128xf32>
    %21 = math.sqrt %20 : vector<128x128xf32>
    %c1_15 = arith.constant 1 : index
    %c0_16 = arith.constant 0 : index
    %c0_17 = arith.constant 0 : index
    %22 = vector.load %arg5[%c1_15, %c0_16, %c0_17] : memref<2x128x128xf32, #tpu.memory_space<vmem>>, vector<1x128x128xf32>
    %23 = vector.shape_cast %22 : vector<1x128x128xf32> to vector<128x128xf32>
    %24 = vector.shape_cast %21 : vector<128x128xf32> to vector<1x128x128xf32>
    tpu.vector_store %arg5[%c1_15, %c0_16, %c0_17], %24 {strides = array<i32>} : memref<2x128x128xf32, #tpu.memory_space<vmem>>, vector<1x128x128xf32>,
    return
  }
  func.func @transform_0(%arg0: i32) -> (i32, i32, i32) {
    %c0_i32 = arith.constant 0 : i32
    %c0_i32_0 = arith.constant 0 : i32
    %c0_i32_1 = arith.constant 0 : i32
    return %c0_i32, %c0_i32_0, %arg0 : i32, i32, i32
  }
  func.func @transform_1(%arg0: i32) -> (i32, i32) {
    %c0_i32 = arith.constant 0 : i32
    %c0_i32_0 = arith.constant 0 : i32
    %c0_i32_1 = arith.constant 0 : i32
    return %c0_i32, %c0_i32_0 : i32, i32
  }
  func.func @transform_2(%arg0: i32) -> (i32, i32) {
    %c0_i32 = arith.constant 0 : i32
    %c0_i32_0 = arith.constant 0 : i32
    %c0_i32_1 = arith.constant 0 : i32
    return %c0_i32, %c0_i32_0 : i32, i32
  }
  func.func @transform_3(%arg0: i32) -> (i32, i32) {
    %c0_i32 = arith.constant 0 : i32
    %c0_i32_0 = arith.constant 0 : i32
    %c0_i32_1 = arith.constant 0 : i32
    return %c0_i32, %c0_i32_0 : i32, i32
  }
  func.func @transform_4(%arg0: i32) -> (i32, i32, i32) {
    %c0_i32 = arith.constant 0 : i32
    %c0_i32_0 = arith.constant 0 : i32
    %c0_i32_1 = arith.constant 0 : i32
    return %c0_i32, %c0_i32_0, %arg0 : i32, i32, i32
  }
}

</mosaic_0001>

<llo_original>
// kernel: range_fourier_net.1
$region0: #{range_fourier_net.1}
  #allocation0 [shape = 'u32[]', space=smem, size = 0x4, offset = 0x4, fixed_abs, tag = 'smem constant byte address 0x4 - core index']
  #allocation1 [shape = 'u32[72,128]{1,0:T(1,128)}', space=vmem, size = 0x9000, scoped, tag = 'internal scratch']
  %s0 = inlined_call_operand.vmem [shape: f32[2,128,256], index: 0, kind: input, shape index: {}]
  %s1 = inlined_call_operand.vmem [shape: f32[128,128], index: 1, kind: input, shape index: {}]
  %s2 = inlined_call_operand.vmem [shape: f32[128,128], index: 2, kind: input, shape index: {}]
  %s3 = inlined_call_operand.vmem [shape: f32[128,128], index: 3, kind: input, shape index: {}]
  %s4 = inlined_call_operand.vmem [shape: f32[2,128,256], index: 4, kind: output, shape index: {}]
  %s5 = sld [smem:[#allocation0]]
  $region121: #{range_fourier_net.1} parent=0
    _
  %s7 = ssub.s32 1, %s5
  %s8 = scalar_select 0, %s7, %s5
  $region1: #{range_fourier_net.1} parent=0
    #allocation2 [shape = 'u8[262144]{0}', space=vmem, size = 0x40000, scoped, tag = 'input window, operand 0']
    #allocation3 [shape = 'u8[262144]{0}', space=vmem, size = 0x40000, scoped, tag = 'output window, operand 0']
    loop: start=0, step=1, limit=4
    $region2: #{range_fourier_net.1} parent=1 // loop_pre_header
      _
    $region3: #{range_fourier_net.1} parent=1 // loop_header
      %s10 = sphi 0, %s14
      %p11 = scmp.ge.s32.totalorder %s10, 4
      %s20 = sphi 0, %s22
      %s23 = sphi 0, %s20
      %s24 = sphi 0, %s23
      %s40 = sphi 0, %s24
      %s44 = sphi 0, %s44
      %s46 = sphi 0, %s44
      %s47 = sphi 0, %s46
      %s61 = sphi 0, %s47
      %s65 = sphi 0, %s65
      %s67 = sphi 0, %s65
      %s68 = sphi 0, %s67
      %s82 = sphi 0, %s68
      %s86 = sphi 0, %s86
      %s88 = sphi 0, %s86
      %s89 = sphi 0, %s88
      %s103 = sphi 0, %s89
      %s109 = sphi 0, %s111
      %s112 = sphi 0, %s109
      %s113 = sphi 0, %s112
      %s129 = sphi 0, %s113
    $region4: #{range_fourier_net.1} parent=1 // loop_header_branch
      %13 = sbr.rel (%p11) target = $region8
    $region5: #{range_fourier_net.1} parent=1 // loop_body
      %s15 = ssub.s32 %s10, 1
      %s16 = ssub.s32 %s10, 2
      %s17 = sadd.s32 %s10, 1
      %s18 = ssub.s32 %s10, %s17
      %p19 = scmp.eq.s32.totalorder %s18, 0
      %s21 = sadd.s32 %s20, 1
      %s22 = scalar_select %p19, %s20, %s21
      %p25 = pneg %p19
      %p26 = scmp.eq.s32.totalorder %s10, 1
      %p27 = por %p25, %p26
      %p28 = scmp.ne.s32.totalorder %s20, %s23
      %p29 = scmp.eq.s32.totalorder %s10, 0
      %p30 = por %p28, %p29
      %p31 = scmp.ne.s32.totalorder %s20, %s23
      %p32 = scmp.eq.s32.totalorder %s15, 1
      %p33 = por %p31, %p32
      %p34 = scmp.ne.s32.totalorder %s23, %s24
      %p35 = scmp.eq.s32.totalorder %s15, 0
      %p36 = por %p34, %p35
      %p37 = scmp.ne.s32.totalorder %s23, %s24
      %p38 = scmp.eq.s32.totalorder %s16, 1
      %p39 = por %p37, %p38
      %p41 = scmp.ne.s32.totalorder %s24, %s40
      %p42 = scmp.eq.s32.totalorder %s16, 0
      %p43 = por %p41, %p42
      %s45 = sadd.s32 %s44, 1
      %p48 = scmp.eq.s32.totalorder %s10, 1
      %p49 = scmp.ne.s32.totalorder %s44, %s46
      %p50 = scmp.eq.s32.totalorder %s10, 0
      %p51 = por %p49, %p50
      %p52 = scmp.ne.s32.totalorder %s44, %s46
      %p53 = scmp.eq.s32.totalorder %s15, 1
      %p54 = por %p52, %p53
      %p55 = scmp.ne.s32.totalorder %s46, %s47
      %p56 = scmp.eq.s32.totalorder %s15, 0
      %p57 = por %p55, %p56
      %p58 = scmp.ne.s32.totalorder %s46, %s47
      %p59 = scmp.eq.s32.totalorder %s16, 1
      %p60 = por %p58, %p59
      %p62 = scmp.ne.s32.totalorder %s47, %s61
      %p63 = scmp.eq.s32.totalorder %s16, 0
      %p64 = por %p62, %p63
      %s66 = sadd.s32 %s65, 1
      %p69 = scmp.eq.s32.totalorder %s10, 1
      %p70 = scmp.ne.s32.totalorder %s65, %s67
      %p71 = scmp.eq.s32.totalorder %s10, 0
      %p72 = por %p70, %p71
      %p73 = scmp.ne.s32.totalorder %s65, %s67
      %p74 = scmp.eq.s32.totalorder %s15, 1
      %p75 = por %p73, %p74
      %p76 = scmp.ne.s32.totalorder %s67, %s68
      %p77 = scmp.eq.s32.totalorder %s15, 0
      %p78 = por %p76, %p77
      %p79 = scmp.ne.s32.totalorder %s67, %s68
      %p80 = scmp.eq.s32.totalorder %s16, 1
      %p81 = por %p79, %p80
      %p83 = scmp.ne.s32.totalorder %s68, %s82
      %p84 = scmp.eq.s32.totalorder %s16, 0
      %p85 = por %p83, %p84
      %s87 = sadd.s32 %s86, 1
      %p90 = scmp.eq.s32.totalorder %s10, 1
      %p91 = scmp.ne.s32.totalorder %s86, %s88
      %p92 = scmp.eq.s32.totalorder %s10, 0
      %p93 = por %p91, %p92
      %p94 = scmp.ne.s32.totalorder %s86, %s88
      %p95 = scmp.eq.s32.totalorder %s15, 1
      %p96 = por %p94, %p95
      %p97 = scmp.ne.s32.totalorder %s88, %s89
      %p98 = scmp.eq.s32.totalorder %s15, 0
      %p99 = por %p97, %p98
      %p100 = scmp.ne.s32.totalorder %s88, %s89
      %p101 = scmp.eq.s32.totalorder %s16, 1
      %p102 = por %p100, %p101
      %p104 = scmp.ne.s32.totalorder %s89, %s103
      %p105 = scmp.eq.s32.totalorder %s16, 0
      %p106 = por %p104, %p105
      %s107 = ssub.s32 %s10, %s17
      %p108 = scmp.eq.s32.totalorder %s107, 0
      %s110 = sadd.s32 %s109, 1
      %s111 = scalar_select %p108, %s109, %s110
      %p114 = pneg %p108
      %p115 = scmp.eq.s32.totalorder %s10, 1
      %p116 = por %p114, %p115
      %p117 = scmp.ne.s32.totalorder %s109, %s112
      %p118 = scmp.eq.s32.totalorder %s10, 0
      %p119 = por %p117, %p118
      %p120 = scmp.ne.s32.totalorder %s109, %s112
      %p121 = scmp.eq.s32.totalorder %s15, 1
      %p122 = por %p120, %p121
      %p123 = scmp.ne.s32.totalorder %s112, %s113
      %p124 = scmp.eq.s32.totalorder %s15, 0
      %p125 = por %p123, %p124
      %p126 = scmp.ne.s32.totalorder %s112, %s113
      %p127 = scmp.eq.s32.totalorder %s16, 1
      %p128 = por %p126, %p127
      %p130 = scmp.ne.s32.totalorder %s113, %s129
      %p131 = scmp.eq.s32.totalorder %s16, 0
      %p132 = por %p130, %p131
      %p133 = scmp.le.s32.totalorder 1, %s10
      %p134 = scmp.lt.s32.totalorder %s10, 3
      %p135 = pnand %p133, %p134
      %p136 = pneg %p135
      // Predicated region
      $region9: #{range_fourier_net.1} parent=5 // pred_check
        _
      $region10: #{range_fourier_net.1} parent=5 // pred_check_branch
        %138 = sbr.rel (%p135) target = $region12
      $region11: #{range_fourier_net.1} parent=5 // pred_region
        %s139 = ssub.s32 %s10, 1
        // Predicated region
        $region13: #{range_fourier_net.1} parent=11 // pred_check
          %p140 = pneg %p57
        $region14: #{range_fourier_net.1} parent=11 // pred_check_branch
          %142 = sbr.rel (%p140) target = $region16
        $region15: #{range_fourier_net.1} parent=11 // pred_region
          _
        $region16: #{range_fourier_net.1} parent=11 // pred_fallthru
          _
        // Predicated region
        $region17: #{range_fourier_net.1} parent=11 // pred_check
          %p143 = pneg %p78
        $region18: #{range_fourier_net.1} parent=11 // pred_check_branch
          %145 = sbr.rel (%p143) target = $region20
        $region19: #{range_fourier_net.1} parent=11 // pred_region
          _
        $region20: #{range_fourier_net.1} parent=11 // pred_fallthru
          _
        // Predicated region
        $region21: #{range_fourier_net.1} parent=11 // pred_check
          %p146 = pneg %p99
        $region22: #{range_fourier_net.1} parent=11 // pred_check_branch
          %148 = sbr.rel (%p146) target = $region24
        $region23: #{range_fourier_net.1} parent=11 // pred_region
          _
        $region24: #{range_fourier_net.1} parent=11 // pred_fallthru
          _
      $region12: #{range_fourier_net.1} parent=5 // pred_fallthru
        _
      %p149 = scmp.lt.s32.totalorder %s10, 2
      // Predicated region
      $region25: #{range_fourier_net.1} parent=5 // pred_check
        %p150 = pneg %p149
      $region26: #{range_fourier_net.1} parent=5 // pred_check_branch
        %152 = sbr.rel (%p150) target = $region28
      $region27: #{range_fourier_net.1} parent=5 // pred_region
        // Predicated region
        $region29: #{range_fourier_net.1} parent=27 // pred_check
          %p153 = pneg %p30
        $region30: #{range_fourier_net.1} parent=27 // pred_check_branch
          %155 = sbr.rel (%p153) target = $region32
        $region31: #{range_fourier_net.1} parent=27 // pred_region
          %s156 = sand.u32 %s20, 1
          %s157 = sand.u32 %s20, 1
          %s158 = smul.addr %s157, 256
          %s159 = scalar_lea.vmem [#allocation2], %s158
          %s160 = smul.addr %s10, 8
          %s161 = scalar_lea.vmem %s0, %s160
          // Predicated region
          $region33: #{range_fourier_net.1} parent=31 // pred_check
            _
          $region34: #{range_fourier_net.1} parent=31 // pred_check_branch
            %163 = sbr.rel (0) target = $region36
          $region35: #{range_fourier_net.1} parent=31 // pred_region
            // Predicated region
            $region37: #{range_fourier_net.1} parent=35 // pred_check
              _
            $region38: #{range_fourier_net.1} parent=35 // pred_check_branch
              %165 = sbr.rel (0) target = $region40
            $region39: #{range_fourier_net.1} parent=35 // pred_region
              // Predicated region
              $region52: #{range_fourier_net.1} parent=39 // pred_check
                _
              $region53: #{range_fourier_net.1} parent=39 // pred_check_branch
                %243 = sbr.rel (0) target = $region55
              $region54: #{range_fourier_net.1} parent=39 // pred_region
                loop: start=0, step=1, limit=1
                $region56: #{range_fourier_net.1} parent=54 // loop_pre_header
                  _
                $region57: #{range_fourier_net.1} parent=54 // loop_header
                  %s245 = sphi 0, %s249
                  %p246 = scmp.ge.s32.totalorder %s245, 1
                  %s250 = sphi %s161, %s161
                  %s251 = sphi %s159, %s159
                $region58: #{range_fourier_net.1} parent=54 // loop_header_branch
                  %248 = sbr.rel (%p246) target = $region62
                $region59: #{range_fourier_net.1} parent=54 // loop_body
                  %v252 = vld [vmem:[%s250] sm:$0xff]
                  %253 = vst [vmem:[%s251] sm:$0xff] %v252
                  %v254 = vld [vmem:[%s250 + $0x10] sm:$0xff]
                  %255 = vst [vmem:[%s251 + $0x8] sm:$0xff] %v254
                  %v256 = vld [vmem:[%s250 + $0x20] sm:$0xff]
                  %257 = vst [vmem:[%s251 + $0x10] sm:$0xff] %v256
                  %v258 = vld [vmem:[%s250 + $0x30] sm:$0xff]
                  %259 = vst [vmem:[%s251 + $0x18] sm:$0xff] %v258
                  %v260 = vld [vmem:[%s250 + $0x40] sm:$0xff]
                  %261 = vst [vmem:[%s251 + $0x20] sm:$0xff] %v260
                  %v262 = vld [vmem:[%s250 + $0x50] sm:$0xff]
                  %263 = vst [vmem:[%s251 + $0x28] sm:$0xff] %v262
                  %v264 = vld [vmem:[%s250 + $0x60] sm:$0xff]
                  %265 = vst [vmem:[%s251 + $0x30] sm:$0xff] %v264
                  %v266 = vld [vmem:[%s250 + $0x70] sm:$0xff]
                  %267 = vst [vmem:[%s251 + $0x38] sm:$0xff] %v266
                  %v268 = vld [vmem:[%s250 + $0x80] sm:$0xff]
                  %269 = vst [vmem:[%s251 + $0x40] sm:$0xff] %v268
                  %v270 = vld [vmem:[%s250 + $0x90] sm:$0xff]
                  %271 = vst [vmem:[%s251 + $0x48] sm:$0xff] %v270
                  %v272 = vld [vmem:[%s250 + $0xa0] sm:$0xff]
                  %273 = vst [vmem:[%s251 + $0x50] sm:$0xff] %v272
                  %v274 = vld [vmem:[%s250 + $0xb0] sm:$0xff]
                  %275 = vst [vmem:[%s251 + $0x58] sm:$0xff] %v274
                  %v276 = vld [vmem:[%s250 + $0xc0] sm:$0xff]
                  %277 = vst [vmem:[%s251 + $0x60] sm:$0xff] %v276
                  %v278 = vld [vmem:[%s250 + $0xd0] sm:$0xff]
                  %279 = vst [vmem:[%s251 + $0x68] sm:$0xff] %v278
                  %v280 = vld [vmem:[%s250 + $0xe0] sm:$0xff]
                  %281 = vst [vmem:[%s251 + $0x70] sm:$0xff] %v280
                  %v282 = vld [vmem:[%s250 + $0xf0] sm:$0xff]
                  %283 = vst [vmem:[%s251 + $0x78] sm:$0xff] %v282
                  %v284 = vld [vmem:[%s250 + $0x100] sm:$0xff]
                  %285 = vst [vmem:[%s251 + $0x80] sm:$0xff] %v284
                  %v286 = vld [vmem:[%s250 + $0x110] sm:$0xff]
                  %287 = vst [vmem:[%s251 + $0x88] sm:$0xff] %v286
                  %v288 = vld [vmem:[%s250 + $0x120] sm:$0xff]
                  %289 = vst [vmem:[%s251 + $0x90] sm:$0xff] %v288
                  %v290 = vld [vmem:[%s250 + $0x130] sm:$0xff]
                  %291 = vst [vmem:[%s251 + $0x98] sm:$0xff] %v290
                  %v292 = vld [vmem:[%s250 + $0x140] sm:$0xff]
                  %293 = vst [vmem:[%s251 + $0xa0] sm:$0xff] %v292
                  %v294 = vld [vmem:[%s250 + $0x150] sm:$0xff]
                  %295 = vst [vmem:[%s251 + $0xa8] sm:$0xff] %v294
                  %v296 = vld [vmem:[%s250 + $0x160] sm:$0xff]
                  %297 = vst [vmem:[%s251 + $0xb0] sm:$0xff] %v296
                  %v298 = vld [vmem:[%s250 + $0x170] sm:$0xff]
                  %299 = vst [vmem:[%s251 + $0xb8] sm:$0xff] %v298
                  %v300 = vld [vmem:[%s250 + $0x180] sm:$0xff]
                  %301 = vst [vmem:[%s251 + $0xc0] sm:$0xff] %v300
                  %v302 = vld [vmem:[%s250 + $0x190] sm:$0xff]
                  %303 = vst [vmem:[%s251 + $0xc8] sm:$0xff] %v302
                  %v304 = vld [vmem:[%s250 + $0x1a0] sm:$0xff]
                  %305 = vst [vmem:[%s251 + $0xd0] sm:$0xff] %v304
                  %v306 = vld [vmem:[%s250 + $0x1b0] sm:$0xff]
                  %307 = vst [vmem:[%s251 + $0xd8] sm:$0xff] %v306
                  %v308 = vld [vmem:[%s250 + $0x1c0] sm:$0xff]
                  %309 = vst [vmem:[%s251 + $0xe0] sm:$0xff] %v308
                  %v310 = vld [vmem:[%s250 + $0x1d0] sm:$0xff]
                  %311 = vst [vmem:[%s251 + $0xe8] sm:$0xff] %v310
                  %v312 = vld [vmem:[%s250 + $0x1e0] sm:$0xff]
                  %313 = vst [vmem:[%s251 + $0xf0] sm:$0xff] %v312
                  %v314 = vld [vmem:[%s250 + $0x1f0] sm:$0xff]
                  %315 = vst [vmem:[%s251 + $0xf8] sm:$0xff] %v314
                $region60: #{range_fourier_net.1} parent=54 // loop_footer
                  %s249 = sadd.s32 1, %s245
                $region61: #{range_fourier_net.1} parent=54 // loop_footer_branch
                  %244 = sbr.rel target = $region57
                $region62: #{range_fourier_net.1} parent=54 // loop_exit
                  _
              $region55: #{range_fourier_net.1} parent=39 // pred_fallthru
                _
              // Predicated region
              $region63: #{range_fourier_net.1} parent=39 // pred_check
                _
              $region64: #{range_fourier_net.1} parent=39 // pred_check_branch
                %317 = sbr.rel target = $region66
              $region65: #{range_fourier_net.1} parent=39 // pred_region
                _
              $region66: #{range_fourier_net.1} parent=39 // pred_fallthru
                _
            $region40: #{range_fourier_net.1} parent=35 // pred_fallthru
              _
            // Predicated region
            $region41: #{range_fourier_net.1} parent=35 // pred_check
              _
            $region42: #{range_fourier_net.1} parent=35 // pred_check_branch
              %167 = sbr.rel target = $region44
            $region43: #{range_fourier_net.1} parent=35 // pred_region
              %s169 = ssub.s32 256, 1
              loop: start=0, step=1, limit=1
              $region45: #{range_fourier_net.1} parent=43 // loop_pre_header
                _
              $region46: #{range_fourier_net.1} parent=43 // loop_header
                %s171 = sphi 0, %s175
                %p172 = scmp.ge.s32.totalorder %s171, 1
                %s176 = sphi %s161, %s161
                %s177 = sphi %s159, %s159
              $region47: #{range_fourier_net.1} parent=43 // loop_header_branch
                %174 = sbr.rel (%p172) target = $region51
              $region48: #{range_fourier_net.1} parent=43 // loop_body
                %v178 = vld [vmem:[%s176] sm:%s169]
                %179 = vst [vmem:[%s177] sm:%s169] %v178
                %v180 = vld [vmem:[%s176 + $0x10] sm:%s169]
                %181 = vst [vmem:[%s177 + $0x8] sm:%s169] %v180
                %v182 = vld [vmem:[%s176 + $0x20] sm:%s169]
                %183 = vst [vmem:[%s177 + $0x10] sm:%s169] %v182
                %v184 = vld [vmem:[%s176 + $0x30] sm:%s169]
                %185 = vst [vmem:[%s177 + $0x18] sm:%s169] %v184
                %v186 = vld [vmem:[%s176 + $0x40] sm:%s169]
                %187 = vst [vmem:[%s177 + $0x20] sm:%s169] %v186
                %v188 = vld [vmem:[%s176 + $0x50] sm:%s169]
                %189 = vst [vmem:[%s177 + $0x28] sm:%s169] %v188
                %v190 = vld [vmem:[%s176 + $0x60] sm:%s169]
                %191 = vst [vmem:[%s177 + $0x30] sm:%s169] %v190
                %v192 = vld [vmem:[%s176 + $0x70] sm:%s169]
                %193 = vst [vmem:[%s177 + $0x38] sm:%s169] %v192
                %v194 = vld [vmem:[%s176 + $0x80] sm:%s169]
                %195 = vst [vmem:[%s177 + $0x40] sm:%s169] %v194
                %v196 = vld [vmem:[%s176 + $0x90] sm:%s169]
                %197 = vst [vmem:[%s177 + $0x48] sm:%s169] %v196
                %v198 = vld [vmem:[%s176 + $0xa0] sm:%s169]
                %199 = vst [vmem:[%s177 + $0x50] sm:%s169] %v198
                %v200 = vld [vmem:[%s176 + $0xb0] sm:%s169]
                %201 = vst [vmem:[%s177 + $0x58] sm:%s169] %v200
                %v202 = vld [vmem:[%s176 + $0xc0] sm:%s169]
                %203 = vst [vmem:[%s177 + $0x60] sm:%s169] %v202
                %v204 = vld [vmem:[%s176 + $0xd0] sm:%s169]
                %205 = vst [vmem:[%s177 + $0x68] sm:%s169] %v204
                %v206 = vld [vmem:[%s176 + $0xe0] sm:%s169]
                %207 = vst [vmem:[%s177 + $0x70] sm:%s169] %v206
                %v208 = vld [vmem:[%s176 + $0xf0] sm:%s169]
                %209 = vst [vmem:[%s177 + $0x78] sm:%s169] %v208
                %v210 = vld [vmem:[%s176 + $0x100] sm:%s169]
                %211 = vst [vmem:[%s177 + $0x80] sm:%s169] %v210
                %v212 = vld [vmem:[%s176 + $0x110] sm:%s169]
                %213 = vst [vmem:[%s177 + $0x88] sm:%s169] %v212
                %v214 = vld [vmem:[%s176 + $0x120] sm:%s169]
                %215 = vst [vmem:[%s177 + $0x90] sm:%s169] %v214
                %v216 = vld [vmem:[%s176 + $0x130] sm:%s169]
                %217 = vst [vmem:[%s177 + $0x98] sm:%s169] %v216
                %v218 = vld [vmem:[%s176 + $0x140] sm:%s169]
                %219 = vst [vmem:[%s177 + $0xa0] sm:%s169] %v218
                %v220 = vld [vmem:[%s176 + $0x150] sm:%s169]
                %221 = vst [vmem:[%s177 + $0xa8] sm:%s169] %v220
                %v222 = vld [vmem:[%s176 + $0x160] sm:%s169]
                %223 = vst [vmem:[%s177 + $0xb0] sm:%s169] %v222
                %v224 = vld [vmem:[%s176 + $0x170] sm:%s169]
                %225 = vst [vmem:[%s177 + $0xb8] sm:%s169] %v224
                %v226 = vld [vmem:[%s176 + $0x180] sm:%s169]
                %227 = vst [vmem:[%s177 + $0xc0] sm:%s169] %v226
                %v228 = vld [vmem:[%s176 + $0x190] sm:%s169]
                %229 = vst [vmem:[%s177 + $0xc8] sm:%s169] %v228
                %v230 = vld [vmem:[%s176 + $0x1a0] sm:%s169]
                %231 = vst [vmem:[%s177 + $0xd0] sm:%s169] %v230
                %v232 = vld [vmem:[%s176 + $0x1b0] sm:%s169]
                %233 = vst [vmem:[%s177 + $0xd8] sm:%s169] %v232
                %v234 = vld [vmem:[%s176 + $0x1c0] sm:%s169]
                %235 = vst [vmem:[%s177 + $0xe0] sm:%s169] %v234
                %v236 = vld [vmem:[%s176 + $0x1d0] sm:%s169]
                %237 = vst [vmem:[%s177 + $0xe8] sm:%s169] %v236
                %v238 = vld [vmem:[%s176 + $0x1e0] sm:%s169]
                %239 = vst [vmem:[%s177 + $0xf0] sm:%s169] %v238
                %v240 = vld [vmem:[%s176 + $0x1f0] sm:%s169]
                %241 = vst [vmem:[%s177 + $0xf8] sm:%s169] %v240
              $region49: #{range_fourier_net.1} parent=43 // loop_footer
                %s175 = sadd.s32 1, %s171
              $region50: #{range_fourier_net.1} parent=43 // loop_footer_branch
                %170 = sbr.rel target = $region46
              $region51: #{range_fourier_net.1} parent=43 // loop_exit
                _
            $region44: #{range_fourier_net.1} parent=35 // pred_fallthru
              _
          $region36: #{range_fourier_net.1} parent=31 // pred_fallthru
            _
          %318 = vnop
        $region32: #{range_fourier_net.1} parent=27 // pred_fallthru
          _
      $region28: #{range_fourier_net.1} parent=5 // pred_fallthru
        _
      %p319 = scmp.le.s32.totalorder 1, %s10
      %p320 = scmp.lt.s32.totalorder %s10, 3
      %p321 = pnand %p319, %p320
      %p322 = pneg %p321
      // Predicated region
      $region67: #{range_fourier_net.1} parent=5 // pred_check
        _
      $region68: #{range_fourier_net.1} parent=5 // pred_check_branch
        %324 = sbr.rel (%p321) target = $region70
      $region69: #{range_fourier_net.1} parent=5 // pred_region
        %s325 = ssub.s32 %s10, 1
        %s326 = sand.u32 %s23, 1
        %s327 = sand.u32 %s23, 1
        %s328 = smul.addr %s327, 256
        %s329 = scalar_lea.vmem [#allocation2], %s328
        // Predicated region
        $region71: #{range_fourier_net.1} parent=69 // pred_check
          %p330 = pneg %p36
        $region72: #{range_fourier_net.1} parent=69 // pred_check_branch
          %332 = sbr.rel (%p330) target = $region74
        $region73: #{range_fourier_net.1} parent=69 // pred_region
          _
        $region74: #{range_fourier_net.1} parent=69 // pred_fallthru
          _
        %s333 = sand.u32 %s23, 1
        %s334 = sand.u32 %s23, 1
        %s335 = smul.addr %s334, 256
        %s336 = scalar_lea.vmem [#allocation2], %s335
        %p337 = pneg %p36
        %p338 = pneg %p33
        %p339 = pneg %p57
        %p340 = pneg %p54
        %p341 = pneg %p78
        %p342 = pneg %p75
        %p343 = pneg %p99
        %p344 = pneg %p96
        %p345 = pneg %p125
        %p346 = pneg %p122
        %s347 = sand.u32 %s112, 1
        %s348 = sand.u32 %s112, 1
        %s349 = smul.addr %s348, 256
        %s350 = scalar_lea.vmem [#allocation3], %s349
        %v351 = vld [vmem:[%s329] sm:$0xff]
        %v352 = vld [vmem:[%s329 + $0x8] sm:$0xff]
        %v353 = vld [vmem:[%s329 + $0x10] sm:$0xff]
        %v354 = vld [vmem:[%s329 + $0x18] sm:$0xff]
        %v355 = vld [vmem:[%s329 + $0x20] sm:$0xff]
        %v356 = vld [vmem:[%s329 + $0x28] sm:$0xff]
        %v357 = vld [vmem:[%s329 + $0x30] sm:$0xff]
        %v358 = vld [vmem:[%s329 + $0x38] sm:$0xff]
        %v359 = vld [vmem:[%s329 + $0x40] sm:$0xff]
        %v360 = vld [vmem:[%s329 + $0x48] sm:$0xff]
        %v361 = vld [vmem:[%s329 + $0x50] sm:$0xff]
        %v362 = vld [vmem:[%s329 + $0x58] sm:$0xff]
        %v363 = vld [vmem:[%s329 + $0x60] sm:$0xff]
        %v364 = vld [vmem:[%s329 + $0x68] sm:$0xff]
        %v365 = vld [vmem:[%s329 + $0x70] sm:$0xff]
        %v366 = vld [vmem:[%s329 + $0x78] sm:$0xff]
        %s367 = scalar_lea.vmem %s329, 128 [#allocation2]
        %v368 = vld [vmem:[%s367] sm:$0xff]
        %v369 = vld [vmem:[%s367 + $0x8] sm:$0xff]
        %v370 = vld [vmem:[%s367 + $0x10] sm:$0xff]
        %v371 = vld [vmem:[%s367 + $0x18] sm:$0xff]
        %v372 = vld [vmem:[%s367 + $0x20] sm:$0xff]
        %v373 = vld [vmem:[%s367 + $0x28] sm:$0xff]
        %v374 = vld [vmem:[%s367 + $0x30] sm:$0xff]
        %v375 = vld [vmem:[%s367 + $0x38] sm:$0xff]
        %v376 = vld [vmem:[%s367 + $0x40] sm:$0xff]
        %v377 = vld [vmem:[%s367 + $0x48] sm:$0xff]
        %v378 = vld [vmem:[%s367 + $0x50] sm:$0xff]
        %v379 = vld [vmem:[%s367 + $0x58] sm:$0xff]
        %v380 = vld [vmem:[%s367 + $0x60] sm:$0xff]
        %v381 = vld [vmem:[%s367 + $0x68] sm:$0xff]
        %v382 = vld [vmem:[%s367 + $0x70] sm:$0xff]
        %v383 = vld [vmem:[%s367 + $0x78] sm:$0xff]
        %v384 = vld [vmem:[%s3] sm:$0xff]
        %v385 = vld [vmem:[%s3 + $0x8] sm:$0xff]
        %v386 = vld [vmem:[%s3 + $0x10] sm:$0xff]
        %v387 = vld [vmem:[%s3 + $0x18] sm:$0xff]
        %v388 = vld [vmem:[%s3 + $0x20] sm:$0xff]
        %v389 = vld [vmem:[%s3 + $0x28] sm:$0xff]
        %v390 = vld [vmem:[%s3 + $0x30] sm:$0xff]
        %v391 = vld [vmem:[%s3 + $0x38] sm:$0xff]
        %v392 = vld [vmem:[%s3 + $0x40] sm:$0xff]
        %v393 = vld [vmem:[%s3 + $0x48] sm:$0xff]
        %v394 = vld [vmem:[%s3 + $0x50] sm:$0xff]
        %v395 = vld [vmem:[%s3 + $0x58] sm:$0xff]
        %v396 = vld [vmem:[%s3 + $0x60] sm:$0xff]
        %v397 = vld [vmem:[%s3 + $0x68] sm:$0xff]
        %v398 = vld [vmem:[%s3 + $0x70] sm:$0xff]
        %v399 = vld [vmem:[%s3 + $0x78] sm:$0xff]
        %400 = vmatpush.msra.mxu0 %v366
        %401 = vmatpush.msra.mxu0 %v365
        %402 = vmatpush.msra.mxu0 %v364
        %403 = vmatpush.msra.mxu0 %v363
        %404 = vmatpush.msra.mxu0 %v362
        %405 = vmatpush.msra.mxu0 %v361
        %406 = vmatpush.msra.mxu0 %v360
        %407 = vmatpush.msra.mxu0 %v359
        %408 = vmatpush.msra.mxu0 %v358
        %409 = vmatpush.msra.mxu0 %v357
        %410 = vmatpush.msra.mxu0 %v356
        %411 = vmatpush.msra.mxu0 %v355
        %412 = vmatpush.msra.mxu0 %v354
        %413 = vmatpush.msra.mxu0 %v353
        %414 = vmatpush.msra.mxu0 %v352
        %415 = vmatpush.msra.mxu0 %v351
        %416 = vmatmul.f32.gmra.mxu0 %v384
        %v417 = vpop.f32.mrf.mxu0
        %v418 = vadd.f32 0.0, %v417
        %419 = vmatmul.f32.gmra.mxu0 %v385
        %v420 = vpop.f32.mrf.mxu0
        %v421 = vadd.f32 0.0, %v420
        %422 = vmatmul.f32.gmra.mxu0 %v386
        %v423 = vpop.f32.mrf.mxu0
        %v424 = vadd.f32 0.0, %v423
        %425 = vmatmul.f32.gmra.mxu0 %v387
        %v426 = vpop.f32.mrf.mxu0
        %v427 = vadd.f32 0.0, %v426
        %428 = vmatmul.f32.gmra.mxu0 %v388
        %v429 = vpop.f32.mrf.mxu0
        %v430 = vadd.f32 0.0, %v429
        %431 = vmatmul.f32.gmra.mxu0 %v389
        %v432 = vpop.f32.mrf.mxu0
        %v433 = vadd.f32 0.0, %v432
        %434 = vmatmul.f32.gmra.mxu0 %v390
        %v435 = vpop.f32.mrf.mxu0
        %v436 = vadd.f32 0.0, %v435
        %437 = vmatmul.f32.gmra.mxu0 %v391
        %v438 = vpop.f32.mrf.mxu0
        %v439 = vadd.f32 0.0, %v438
        %440 = vmatmul.f32.gmra.mxu0 %v392
        %v441 = vpop.f32.mrf.mxu0
        %v442 = vadd.f32 0.0, %v441
        %443 = vmatmul.f32.gmra.mxu0 %v393
        %v444 = vpop.f32.mrf.mxu0
        %v445 = vadd.f32 0.0, %v444
        %446 = vmatmul.f32.gmra.mxu0 %v394
        %v447 = vpop.f32.mrf.mxu0
        %v448 = vadd.f32 0.0, %v447
        %449 = vmatmul.f32.gmra.mxu0 %v395
        %v450 = vpop.f32.mrf.mxu0
        %v451 = vadd.f32 0.0, %v450
        %452 = vmatmul.f32.gmra.mxu0 %v396
        %v453 = vpop.f32.mrf.mxu0
        %v454 = vadd.f32 0.0, %v453
        %455 = vmatmul.f32.gmra.mxu0 %v397
        %v456 = vpop.f32.mrf.mxu0
        %v457 = vadd.f32 0.0, %v456
        %458 = vmatmul.f32.gmra.mxu0 %v398
        %v459 = vpop.f32.mrf.mxu0
        %v460 = vadd.f32 0.0, %v459
        %461 = vmatmul.f32.gmra.mxu0 %v399
        %v462 = vpop.f32.mrf.mxu0
        %v463 = vadd.f32 0.0, %v462
        %464 = vdwg.mxu0
        %v465 = vld [vmem:[%s1] sm:$0xff]
        %v466 = vld [vmem:[%s1 + $0x8] sm:$0xff]
        %v467 = vld [vmem:[%s1 + $0x10] sm:$0xff]
        %v468 = vld [vmem:[%s1 + $0x18] sm:$0xff]
        %v469 = vld [vmem:[%s1 + $0x20] sm:$0xff]
        %v470 = vld [vmem:[%s1 + $0x28] sm:$0xff]
        %v471 = vld [vmem:[%s1 + $0x30] sm:$0xff]
        %v472 = vld [vmem:[%s1 + $0x38] sm:$0xff]
        %v473 = vld [vmem:[%s1 + $0x40] sm:$0xff]
        %v474 = vld [vmem:[%s1 + $0x48] sm:$0xff]
        %v475 = vld [vmem:[%s1 + $0x50] sm:$0xff]
        %v476 = vld [vmem:[%s1 + $0x58] sm:$0xff]
        %v477 = vld [vmem:[%s1 + $0x60] sm:$0xff]
        %v478 = vld [vmem:[%s1 + $0x68] sm:$0xff]
        %v479 = vld [vmem:[%s1 + $0x70] sm:$0xff]
        %v480 = vld [vmem:[%s1 + $0x78] sm:$0xff]
        %v481 = vsub.f32 %v368, %v351
        %v482 = vsub.f32 %v369, %v352
        %v483 = vsub.f32 %v370, %v353
        %v484 = vsub.f32 %v371, %v354
        %v485 = vsub.f32 %v372, %v355
        %v486 = vsub.f32 %v373, %v356
        %v487 = vsub.f32 %v374, %v357
        %v488 = vsub.f32 %v375, %v358
        %v489 = vsub.f32 %v376, %v359
        %v490 = vsub.f32 %v377, %v360
        %v491 = vsub.f32 %v378, %v361
        %v492 = vsub.f32 %v379, %v362
        %v493 = vsub.f32 %v380, %v363
        %v494 = vsub.f32 %v381, %v364
        %v495 = vsub.f32 %v382, %v365
        %v496 = vsub.f32 %v383, %v366
        %497 = vmatpush.msra.mxu0 %v496
        %498 = vmatpush.msra.mxu0 %v495
        %499 = vmatpush.msra.mxu0 %v494
        %500 = vmatpush.msra.mxu0 %v493
        %501 = vmatpush.msra.mxu0 %v492
        %502 = vmatpush.msra.mxu0 %v491
        %503 = vmatpush.msra.mxu0 %v490
        %504 = vmatpush.msra.mxu0 %v489
        %505 = vmatpush.msra.mxu0 %v488
        %506 = vmatpush.msra.mxu0 %v487
        %507 = vmatpush.msra.mxu0 %v486
        %508 = vmatpush.msra.mxu0 %v485
        %509 = vmatpush.msra.mxu0 %v484
        %510 = vmatpush.msra.mxu0 %v483
        %511 = vmatpush.msra.mxu0 %v482
        %512 = vmatpush.msra.mxu0 %v481
        %513 = vmatmul.f32.gmra.mxu0 %v465
        %v514 = vpop.f32.mrf.mxu0
        %v515 = vadd.f32 0.0, %v514
        %516 = vmatmul.f32.gmra.mxu0 %v466
        %v517 = vpop.f32.mrf.mxu0
        %v518 = vadd.f32 0.0, %v517
        %519 = vmatmul.f32.gmra.mxu0 %v467
        %v520 = vpop.f32.mrf.mxu0
        %v521 = vadd.f32 0.0, %v520
        %522 = vmatmul.f32.gmra.mxu0 %v468
        %v523 = vpop.f32.mrf.mxu0
        %v524 = vadd.f32 0.0, %v523
        %525 = vmatmul.f32.gmra.mxu0 %v469
        %v526 = vpop.f32.mrf.mxu0
        %v527 = vadd.f32 0.0, %v526
        %528 = vmatmul.f32.gmra.mxu0 %v470
        %v529 = vpop.f32.mrf.mxu0
        %v530 = vadd.f32 0.0, %v529
        %531 = vmatmul.f32.gmra.mxu0 %v471
        %v532 = vpop.f32.mrf.mxu0
        %v533 = vadd.f32 0.0, %v532
        %534 = vmatmul.f32.gmra.mxu0 %v472
        %v535 = vpop.f32.mrf.mxu0
        %v536 = vadd.f32 0.0, %v535
        %537 = vmatmul.f32.gmra.mxu0 %v473
        %v538 = vpop.f32.mrf.mxu0
        %v539 = vadd.f32 0.0, %v538
        %540 = vmatmul.f32.gmra.mxu0 %v474
        %v541 = vpop.f32.mrf.mxu0
        %v542 = vadd.f32 0.0, %v541
        %543 = vmatmul.f32.gmra.mxu0 %v475
        %v544 = vpop.f32.mrf.mxu0
        %v545 = vadd.f32 0.0, %v544
        %546 = vmatmul.f32.gmra.mxu0 %v476
        %v547 = vpop.f32.mrf.mxu0
        %v548 = vadd.f32 0.0, %v547
        %549 = vmatmul.f32.gmra.mxu0 %v477
        %v550 = vpop.f32.mrf.mxu0
        %v551 = vadd.f32 0.0, %v550
        %552 = vmatmul.f32.gmra.mxu0 %v478
        %v553 = vpop.f32.mrf.mxu0
        %v554 = vadd.f32 0.0, %v553
        %555 = vmatmul.f32.gmra.mxu0 %v479
        %v556 = vpop.f32.mrf.mxu0
        %v557 = vadd.f32 0.0, %v556
        %558 = vmatmul.f32.gmra.mxu0 %v480
        %v559 = vpop.f32.mrf.mxu0
        %v560 = vadd.f32 0.0, %v559
        %561 = vdwg.mxu0
        %v562 = vld [vmem:[%s2] sm:$0xff]
        %v563 = vld [vmem:[%s2 + $0x8] sm:$0xff]
        %v564 = vld [vmem:[%s2 + $0x10] sm:$0xff]
        %v565 = vld [vmem:[%s2 + $0x18] sm:$0xff]
        %v566 = vld [vmem:[%s2 + $0x20] sm:$0xff]
        %v567 = vld [vmem:[%s2 + $0x28] sm:$0xff]
        %v568 = vld [vmem:[%s2 + $0x30] sm:$0xff]
        %v569 = vld [vmem:[%s2 + $0x38] sm:$0xff]
        %v570 = vld [vmem:[%s2 + $0x40] sm:$0xff]
        %v571 = vld [vmem:[%s2 + $0x48] sm:$0xff]
        %v572 = vld [vmem:[%s2 + $0x50] sm:$0xff]
        %v573 = vld [vmem:[%s2 + $0x58] sm:$0xff]
        %v574 = vld [vmem:[%s2 + $0x60] sm:$0xff]
        %v575 = vld [vmem:[%s2 + $0x68] sm:$0xff]
        %v576 = vld [vmem:[%s2 + $0x70] sm:$0xff]
        %v577 = vld [vmem:[%s2 + $0x78] sm:$0xff]
        %v578 = vadd.f32 %v351, %v368
        %v579 = vadd.f32 %v352, %v369
        %v580 = vadd.f32 %v353, %v370
        %v581 = vadd.f32 %v354, %v371
        %v582 = vadd.f32 %v355, %v372
        %v583 = vadd.f32 %v356, %v373
        %v584 = vadd.f32 %v357, %v374
        %v585 = vadd.f32 %v358, %v375
        %v586 = vadd.f32 %v359, %v376
        %v587 = vadd.f32 %v360, %v377
        %v588 = vadd.f32 %v361, %v378
        %v589 = vadd.f32 %v362, %v379
        %v590 = vadd.f32 %v363, %v380
        %v591 = vadd.f32 %v364, %v381
        %v592 = vadd.f32 %v365, %v382
        %v593 = vadd.f32 %v366, %v383
        %594 = vmatpush.msra.mxu0 %v593
        %595 = vmatpush.msra.mxu0 %v592
        %596 = vmatpush.msra.mxu0 %v591
        %597 = vmatpush.msra.mxu0 %v590
        %598 = vmatpush.msra.mxu0 %v589
        %599 = vmatpush.msra.mxu0 %v588
        %600 = vmatpush.msra.mxu0 %v587
        %601 = vmatpush.msra.mxu0 %v586
        %602 = vmatpush.msra.mxu0 %v585
        %603 = vmatpush.msra.mxu0 %v584
        %604 = vmatpush.msra.mxu0 %v583
        %605 = vmatpush.msra.mxu0 %v582
        %606 = vmatpush.msra.mxu0 %v581
        %607 = vmatpush.msra.mxu0 %v580
        %608 = vmatpush.msra.mxu0 %v579
        %609 = vmatpush.msra.mxu0 %v578
        %610 = vmatmul.f32.gmra.mxu0 %v562
        %v611 = vpop.f32.mrf.mxu0
        %v612 = vadd.f32 0.0, %v611
        %613 = vmatmul.f32.gmra.mxu0 %v563
        %v614 = vpop.f32.mrf.mxu0
        %v615 = vadd.f32 0.0, %v614
        %616 = vmatmul.f32.gmra.mxu0 %v564
        %v617 = vpop.f32.mrf.mxu0
        %v618 = vadd.f32 0.0, %v617
        %619 = vmatmul.f32.gmra.mxu0 %v565
        %v620 = vpop.f32.mrf.mxu0
        %v621 = vadd.f32 0.0, %v620
        %622 = vmatmul.f32.gmra.mxu0 %v566
        %v623 = vpop.f32.mrf.mxu0
        %v624 = vadd.f32 0.0, %v623
        %625 = vmatmul.f32.gmra.mxu0 %v567
        %v626 = vpop.f32.mrf.mxu0
        %v627 = vadd.f32 0.0, %v626
        %628 = vmatmul.f32.gmra.mxu0 %v568
        %v629 = vpop.f32.mrf.mxu0
        %v630 = vadd.f32 0.0, %v629
        %631 = vmatmul.f32.gmra.mxu0 %v569
        %v632 = vpop.f32.mrf.mxu0
        %v633 = vadd.f32 0.0, %v632
        %634 = vmatmul.f32.gmra.mxu0 %v570
        %v635 = vpop.f32.mrf.mxu0
        %v636 = vadd.f32 0.0, %v635
        %637 = vmatmul.f32.gmra.mxu0 %v571
        %v638 = vpop.f32.mrf.mxu0
        %v639 = vadd.f32 0.0, %v638
        %640 = vmatmul.f32.gmra.mxu0 %v572
        %v641 = vpop.f32.mrf.mxu0
        %v642 = vadd.f32 0.0, %v641
        %643 = vmatmul.f32.gmra.mxu0 %v573
        %v644 = vpop.f32.mrf.mxu0
        %v645 = vadd.f32 0.0, %v644
        %646 = vmatmul.f32.gmra.mxu0 %v574
        %v647 = vpop.f32.mrf.mxu0
        %v648 = vadd.f32 0.0, %v647
        %649 = vmatmul.f32.gmra.mxu0 %v575
        %v650 = vpop.f32.mrf.mxu0
        %v651 = vadd.f32 0.0, %v650
        %652 = vmatmul.f32.gmra.mxu0 %v576
        %v653 = vpop.f32.mrf.mxu0
        %v654 = vadd.f32 0.0, %v653
        %655 = vmatmul.f32.gmra.mxu0 %v577
        %v656 = vpop.f32.mrf.mxu0
        %v657 = vadd.f32 0.0, %v656
        %658 = vdwg.mxu0
        %v659 = vsub.f32 %v418, %v612
        %v660 = vsub.f32 %v421, %v615
        %v661 = vsub.f32 %v424, %v618
        %v662 = vsub.f32 %v427, %v621
        %v663 = vsub.f32 %v430, %v624
        %v664 = vsub.f32 %v433, %v627
        %v665 = vsub.f32 %v436, %v630
        %v666 = vsub.f32 %v439, %v633
        %v667 = vsub.f32 %v442, %v636
        %v668 = vsub.f32 %v445, %v639
        %v669 = vsub.f32 %v448, %v642
        %v670 = vsub.f32 %v451, %v645
        %v671 = vsub.f32 %v454, %v648
        %v672 = vsub.f32 %v457, %v651
        %v673 = vsub.f32 %v460, %v654
        %v674 = vsub.f32 %v463, %v657
        %v675 = vadd.f32 %v418, %v515
        %v676 = vadd.f32 %v421, %v518
        %v677 = vadd.f32 %v424, %v521
        %v678 = vadd.f32 %v427, %v524
        %v679 = vadd.f32 %v430, %v527
        %v680 = vadd.f32 %v433, %v530
        %v681 = vadd.f32 %v436, %v533
        %v682 = vadd.f32 %v439, %v536
        %v683 = vadd.f32 %v442, %v539
        %v684 = vadd.f32 %v445, %v542
        %v685 = vadd.f32 %v448, %v545
        %v686 = vadd.f32 %v451, %v548
        %v687 = vadd.f32 %v454, %v551
        %v688 = vadd.f32 %v457, %v554
        %v689 = vadd.f32 %v460, %v557
        %v690 = vadd.f32 %v463, %v560
        %v691 = vand.u32 2147483647, %v659
        %v692 = vand.u32 2147483647, %v675
        %v693 = vmin.f32 %v691, %v692
        %v694 = vmax.f32 %v691, %v692
        %v695 = vrcp.pop %v694
        %v696 = vmul.f32 %v694, %v695
        %v697 = vsub.f32 1.0, %v696
        %v698 = vmul.f32 %v695, %v697
        %v699 = vadd.f32 %v695, %v698
        %vm700 = vweird.f32 %v694
        %vm701 = vweird.f32 %v695
        %vm702 = vmor %vm700, %vm701
        %v703 = vsel %vm702, %v695, %v699
        %v704 = vand.u32 2147483647, %v694
        %vm705 = vcmp.eq.f32.partialorder %v704, 8.507059e+37
        %v706 = vand.u32 %v694, 2147483648
        %v707 = vor.u32 1.1754944e-38, %v706
        %v708 = vsel %vm705, %v707, %v703
        %v709 = vmul.f32 %v693, %v708
        %v710 = vmul.f32 %v709, %v709
        %v711 = vmul.f32 0.002785687, %v710
        %v712 = vadd.f32 %v711, -0.015866
        %v713 = vmul.f32 %v712, %v710
        %v714 = vadd.f32 %v713, 0.04247222
        %v715 = vmul.f32 %v714, %v710
        %v716 = vadd.f32 %v715, -0.074975304
        %v717 = vmul.f32 %v716, %v710
        %v718 = vadd.f32 %v717, 0.1064488
        %v719 = vmul.f32 %v718, %v710
        %v720 = vadd.f32 %v719, -0.14207031
        %v721 = vmul.f32 %v720, %v710
        %v722 = vadd.f32 %v721, 0.19993454
        %v723 = vmul.f32 %v722, %v710
        %v724 = vadd.f32 %v723, -0.33333147
        %v725 = vmul.f32 %v724, %v710
        %v726 = vmul.f32 %v725, %v709
        %v727 = vadd.f32 %v726, %v709
        %vm728 = vcmp.gt.f32.partialorder %v692, %v691
        %v729 = vsub.f32 1.5707964, %v727
        %v730 = vsel %vm728, %v729, %v727
        %vm731 = vcmp.lt.f32.partialorder %v659, 0.0
        %v732 = vsub.f32 3.1415927, %v730
        %v733 = vsel %vm731, %v732, %v730
        %vm734 = vcmp.lt.s32.totalorder %v659, 0
        %v735 = vsel %vm734, 3.1415927, 0.0
        %vm736 = vcmp.eq.f32.partialorder %v675, 0.0
        %v737 = vsel %vm736, %v735, %v733
        %vm738 = vcmp.ne.f32.partialorder %v659, %v659
        %vm739 = vcmp.ne.f32.partialorder %v675, %v675
        %vm740 = vmor %vm738, %vm739
        %v741 = vsel %vm740, nan, %v737
        %vm742 = vcmp.lt.f32.partialorder %v659, 0.0
        %v743 = vsel %vm742, 2.3561945, 0.7853982
        %vm744 = vcmp.eq.s32.totalorder %v691, inf
        %vm745 = vcmp.eq.s32.totalorder %v692, inf
        %vm746 = vmand %vm744, %vm745
        %v747 = vsel %vm746, %v743, %v741
        %v748 = vand.u32 2147483647, %v747
        %v749 = vand.u32 %v675, 2147483648
        %v750 = vor.u32 %v748, %v749
        %v751 = vand.u32 2147483647, %v660
        %v752 = vand.u32 2147483647, %v676
        %v753 = vmin.f32 %v751, %v752
        %v754 = vmax.f32 %v751, %v752
        %v755 = vrcp.pop %v754
        %v756 = vmul.f32 %v754, %v755
        %v757 = vsub.f32 1.0, %v756
        %v758 = vmul.f32 %v755, %v757
        %v759 = vadd.f32 %v755, %v758
        %vm760 = vweird.f32 %v754
        %vm761 = vweird.f32 %v755
        %vm762 = vmor %vm760, %vm761
        %v763 = vsel %vm762, %v755, %v759
        %v764 = vand.u32 2147483647, %v754
        %vm765 = vcmp.eq.f32.partialorder %v764, 8.507059e+37
        %v766 = vand.u32 %v754, 2147483648
        %v767 = vor.u32 1.1754944e-38, %v766
        %v768 = vsel %vm765, %v767, %v763
        %v769 = vmul.f32 %v753, %v768
        %v770 = vmul.f32 %v769, %v769
        %v771 = vmul.f32 0.002785687, %v770
        %v772 = vadd.f32 %v771, -0.015866
        %v773 = vmul.f32 %v772, %v770
        %v774 = vadd.f32 %v773, 0.04247222
        %v775 = vmul.f32 %v774, %v770
        %v776 = vadd.f32 %v775, -0.074975304
        %v777 = vmul.f32 %v776, %v770
        %v778 = vadd.f32 %v777, 0.1064488
        %v779 = vmul.f32 %v778, %v770
        %v780 = vadd.f32 %v779, -0.14207031
        %v781 = vmul.f32 %v780, %v770
        %v782 = vadd.f32 %v781, 0.19993454
        %v783 = vmul.f32 %v782, %v770
        %v784 = vadd.f32 %v783, -0.33333147
        %v785 = vmul.f32 %v784, %v770
        %v786 = vmul.f32 %v785, %v769
        %v787 = vadd.f32 %v786, %v769
        %vm788 = vcmp.gt.f32.partialorder %v752, %v751
        %v789 = vsub.f32 1.5707964, %v787
        %v790 = vsel %vm788, %v789, %v787
        %vm791 = vcmp.lt.f32.partialorder %v660, 0.0
        %v792 = vsub.f32 3.1415927, %v790
        %v793 = vsel %vm791, %v792, %v790
        %vm794 = vcmp.lt.s32.totalorder %v660, 0
        %v795 = vsel %vm794, 3.1415927, 0.0
        %vm796 = vcmp.eq.f32.partialorder %v676, 0.0
        %v797 = vsel %vm796, %v795, %v793
        %vm798 = vcmp.ne.f32.partialorder %v660, %v660
        %vm799 = vcmp.ne.f32.partialorder %v676, %v676
        %vm800 = vmor %vm798, %vm799
        %v801 = vsel %vm800, nan, %v797
        %vm802 = vcmp.lt.f32.partialorder %v660, 0.0
        %v803 = vsel %vm802, 2.3561945, 0.7853982
        %vm804 = vcmp.eq.s32.totalorder %v751, inf
        %vm805 = vcmp.eq.s32.totalorder %v752, inf
        %vm806 = vmand %vm804, %vm805
        %v807 = vsel %vm806, %v803, %v801
        %v808 = vand.u32 2147483647, %v807
        %v809 = vand.u32 %v676, 2147483648
        %v810 = vor.u32 %v808, %v809
        %v811 = vand.u32 2147483647, %v661
        %v812 = vand.u32 2147483647, %v677
        %v813 = vmin.f32 %v811, %v812
        %v814 = vmax.f32 %v811, %v812
        %v815 = vrcp.pop %v814
        %v816 = vmul.f32 %v814, %v815
        %v817 = vsub.f32 1.0, %v816
        %v818 = vmul.f32 %v815, %v817
        %v819 = vadd.f32 %v815, %v818
        %vm820 = vweird.f32 %v814
        %vm821 = vweird.f32 %v815
        %vm822 = vmor %vm820, %vm821
        %v823 = vsel %vm822, %v815, %v819
        %v824 = vand.u32 2147483647, %v814
        %vm825 = vcmp.eq.f32.partialorder %v824, 8.507059e+37
        %v826 = vand.u32 %v814, 2147483648
        %v827 = vor.u32 1.1754944e-38, %v826
        %v828 = vsel %vm825, %v827, %v823
        %v829 = vmul.f32 %v813, %v828
        %v830 = vmul.f32 %v829, %v829
        %v831 = vmul.f32 0.002785687, %v830
        %v832 = vadd.f32 %v831, -0.015866
        %v833 = vmul.f32 %v832, %v830
        %v834 = vadd.f32 %v833, 0.04247222
        %v835 = vmul.f32 %v834, %v830
        %v836 = vadd.f32 %v835, -0.074975304
        %v837 = vmul.f32 %v836, %v830
        %v838 = vadd.f32 %v837, 0.1064488
        %v839 = vmul.f32 %v838, %v830
        %v840 = vadd.f32 %v839, -0.14207031
        %v841 = vmul.f32 %v840, %v830
        %v842 = vadd.f32 %v841, 0.19993454
        %v843 = vmul.f32 %v842, %v830
        %v844 = vadd.f32 %v843, -0.33333147
        %v845 = vmul.f32 %v844, %v830
        %v846 = vmul.f32 %v845, %v829
        %v847 = vadd.f32 %v846, %v829
        %vm848 = vcmp.gt.f32.partialorder %v812, %v811
        %v849 = vsub.f32 1.5707964, %v847
        %v850 = vsel %vm848, %v849, %v847
        %vm851 = vcmp.lt.f32.partialorder %v661, 0.0
        %v852 = vsub.f32 3.1415927, %v850
        %v853 = vsel %vm851, %v852, %v850
        %vm854 = vcmp.lt.s32.totalorder %v661, 0
        %v855 = vsel %vm854, 3.1415927, 0.0
        %vm856 = vcmp.eq.f32.partialorder %v677, 0.0
        %v857 = vsel %vm856, %v855, %v853
        %vm858 = vcmp.ne.f32.partialorder %v661, %v661
        %vm859 = vcmp.ne.f32.partialorder %v677, %v677
        %vm860 = vmor %vm858, %vm859
        %v861 = vsel %vm860, nan, %v857
        %vm862 = vcmp.lt.f32.partialorder %v661, 0.0
        %v863 = vsel %vm862, 2.3561945, 0.7853982
        %vm864 = vcmp.eq.s32.totalorder %v811, inf
        %vm865 = vcmp.eq.s32.totalorder %v812, inf
        %vm866 = vmand %vm864, %vm865
        %v867 = vsel %vm866, %v863, %v861
        %v868 = vand.u32 2147483647, %v867
        %v869 = vand.u32 %v677, 2147483648
        %v870 = vor.u32 %v868, %v869
        %v871 = vand.u32 2147483647, %v662
        %v872 = vand.u32 2147483647, %v678
        %v873 = vmin.f32 %v871, %v872
        %v874 = vmax.f32 %v871, %v872
        %v875 = vrcp.pop %v874
        %v876 = vmul.f32 %v874, %v875
        %v877 = vsub.f32 1.0, %v876
        %v878 = vmul.f32 %v875, %v877
        %v879 = vadd.f32 %v875, %v878
        %vm880 = vweird.f32 %v874
        %vm881 = vweird.f32 %v875
        %vm882 = vmor %vm880, %vm881
        %v883 = vsel %vm882, %v875, %v879
        %v884 = vand.u32 2147483647, %v874
        %vm885 = vcmp.eq.f32.partialorder %v884, 8.507059e+37
        %v886 = vand.u32 %v874, 2147483648
        %v887 = vor.u32 1.1754944e-38, %v886
        %v888 = vsel %vm885, %v887, %v883
        %v889 = vmul.f32 %v873, %v888
        %v890 = vmul.f32 %v889, %v889
        %v891 = vmul.f32 0.002785687, %v890
        %v892 = vadd.f32 %v891, -0.015866
        %v893 = vmul.f32 %v892, %v890
        %v894 = vadd.f32 %v893, 0.04247222
        %v895 = vmul.f32 %v894, %v890
        %v896 = vadd.f32 %v895, -0.074975304
        %v897 = vmul.f32 %v896, %v890
        %v898 = vadd.f32 %v897, 0.1064488
        %v899 = vmul.f32 %v898, %v890
        %v900 = vadd.f32 %v899, -0.14207031
        %v901 = vmul.f32 %v900, %v890
        %v902 = vadd.f32 %v901, 0.19993454
        %v903 = vmul.f32 %v902, %v890
        %v904 = vadd.f32 %v903, -0.33333147
        %v905 = vmul.f32 %v904, %v890
        %v906 = vmul.f32 %v905, %v889
        %v907 = vadd.f32 %v906, %v889
        %vm908 = vcmp.gt.f32.partialorder %v872, %v871
        %v909 = vsub.f32 1.5707964, %v907
        %v910 = vsel %vm908, %v909, %v907
        %vm911 = vcmp.lt.f32.partialorder %v662, 0.0
        %v912 = vsub.f32 3.1415927, %v910
        %v913 = vsel %vm911, %v912, %v910
        %vm914 = vcmp.lt.s32.totalorder %v662, 0
        %v915 = vsel %vm914, 3.1415927, 0.0
        %vm916 = vcmp.eq.f32.partialorder %v678, 0.0
        %v917 = vsel %vm916, %v915, %v913
        %vm918 = vcmp.ne.f32.partialorder %v662, %v662
        %vm919 = vcmp.ne.f32.partialorder %v678, %v678
        %vm920 = vmor %vm918, %vm919
        %v921 = vsel %vm920, nan, %v917
        %vm922 = vcmp.lt.f32.partialorder %v662, 0.0
        %v923 = vsel %vm922, 2.3561945, 0.7853982
        %vm924 = vcmp.eq.s32.totalorder %v871, inf
        %vm925 = vcmp.eq.s32.totalorder %v872, inf
        %vm926 = vmand %vm924, %vm925
        %v927 = vsel %vm926, %v923, %v921
        %v928 = vand.u32 2147483647, %v927
        %v929 = vand.u32 %v678, 2147483648
        %v930 = vor.u32 %v928, %v929
        %v931 = vand.u32 2147483647, %v663
        %v932 = vand.u32 2147483647, %v679
        %v933 = vmin.f32 %v931, %v932
        %v934 = vmax.f32 %v931, %v932
        %v935 = vrcp.pop %v934
        %v936 = vmul.f32 %v934, %v935
        %v937 = vsub.f32 1.0, %v936
        %v938 = vmul.f32 %v935, %v937
        %v939 = vadd.f32 %v935, %v938
        %vm940 = vweird.f32 %v934
        %vm941 = vweird.f32 %v935
        %vm942 = vmor %vm940, %vm941
        %v943 = vsel %vm942, %v935, %v939
        %v944 = vand.u32 2147483647, %v934
        %vm945 = vcmp.eq.f32.partialorder %v944, 8.507059e+37
        %v946 = vand.u32 %v934, 2147483648
        %v947 = vor.u32 1.1754944e-38, %v946
        %v948 = vsel %vm945, %v947, %v943
        %v949 = vmul.f32 %v933, %v948
        %v950 = vmul.f32 %v949, %v949
        %v951 = vmul.f32 0.002785687, %v950
        %v952 = vadd.f32 %v951, -0.015866
        %v953 = vmul.f32 %v952, %v950
        %v954 = vadd.f32 %v953, 0.04247222
        %v955 = vmul.f32 %v954, %v950
        %v956 = vadd.f32 %v955, -0.074975304
        %v957 = vmul.f32 %v956, %v950
        %v958 = vadd.f32 %v957, 0.1064488
        %v959 = vmul.f32 %v958, %v950
        %v960 = vadd.f32 %v959, -0.14207031
        %v961 = vmul.f32 %v960, %v950
        %v962 = vadd.f32 %v961, 0.19993454
        %v963 = vmul.f32 %v962, %v950
        %v964 = vadd.f32 %v963, -0.33333147
        %v965 = vmul.f32 %v964, %v950
        %v966 = vmul.f32 %v965, %v949
        %v967 = vadd.f32 %v966, %v949
        %vm968 = vcmp.gt.f32.partialorder %v932, %v931
        %v969 = vsub.f32 1.5707964, %v967
        %v970 = vsel %vm968, %v969, %v967
        %vm971 = vcmp.lt.f32.partialorder %v663, 0.0
        %v972 = vsub.f32 3.1415927, %v970
        %v973 = vsel %vm971, %v972, %v970
        %vm974 = vcmp.lt.s32.totalorder %v663, 0
        %v975 = vsel %vm974, 3.1415927, 0.0
        %vm976 = vcmp.eq.f32.partialorder %v679, 0.0
        %v977 = vsel %vm976, %v975, %v973
        %vm978 = vcmp.ne.f32.partialorder %v663, %v663
        %vm979 = vcmp.ne.f32.partialorder %v679, %v679
        %vm980 = vmor %vm978, %vm979
        %v981 = vsel %vm980, nan, %v977
        %vm982 = vcmp.lt.f32.partialorder %v663, 0.0
        %v983 = vsel %vm982, 2.3561945, 0.7853982
        %vm984 = vcmp.eq.s32.totalorder %v931, inf
        %vm985 = vcmp.eq.s32.totalorder %v932, inf
        %vm986 = vmand %vm984, %vm985
        %v987 = vsel %vm986, %v983, %v981
        %v988 = vand.u32 2147483647, %v987
        %v989 = vand.u32 %v679, 2147483648
        %v990 = vor.u32 %v988, %v989
        %v991 = vand.u32 2147483647, %v664
        %v992 = vand.u32 2147483647, %v680
        %v993 = vmin.f32 %v991, %v992
        %v994 = vmax.f32 %v991, %v992
        %v995 = vrcp.pop %v994
        %v996 = vmul.f32 %v994, %v995
        %v997 = vsub.f32 1.0, %v996
        %v998 = vmul.f32 %v995, %v997
        %v999 = vadd.f32 %v995, %v998
        %vm1000 = vweird.f32 %v994
        %vm1001 = vweird.f32 %v995
        %vm1002 = vmor %vm1000, %vm1001
        %v1003 = vsel %vm1002, %v995, %v999
        %v1004 = vand.u32 2147483647, %v994
        %vm1005 = vcmp.eq.f32.partialorder %v1004, 8.507059e+37
        %v1006 = vand.u32 %v994, 2147483648
        %v1007 = vor.u32 1.1754944e-38, %v1006
        %v1008 = vsel %vm1005, %v1007, %v1003
        %v1009 = vmul.f32 %v993, %v1008
        %v1010 = vmul.f32 %v1009, %v1009
        %v1011 = vmul.f32 0.002785687, %v1010
        %v1012 = vadd.f32 %v1011, -0.015866
        %v1013 = vmul.f32 %v1012, %v1010
        %v1014 = vadd.f32 %v1013, 0.04247222
        %v1015 = vmul.f32 %v1014, %v1010
        %v1016 = vadd.f32 %v1015, -0.074975304
        %v1017 = vmul.f32 %v1016, %v1010
        %v1018 = vadd.f32 %v1017, 0.1064488
        %v1019 = vmul.f32 %v1018, %v1010
        %v1020 = vadd.f32 %v1019, -0.14207031
        %v1021 = vmul.f32 %v1020, %v1010
        %v1022 = vadd.f32 %v1021, 0.19993454
        %v1023 = vmul.f32 %v1022, %v1010
        %v1024 = vadd.f32 %v1023, -0.33333147
        %v1025 = vmul.f32 %v1024, %v1010
        %v1026 = vmul.f32 %v1025, %v1009
        %v1027 = vadd.f32 %v1026, %v1009
        %vm1028 = vcmp.gt.f32.partialorder %v992, %v991
        %v1029 = vsub.f32 1.5707964, %v1027
        %v1030 = vsel %vm1028, %v1029, %v1027
        %vm1031 = vcmp.lt.f32.partialorder %v664, 0.0
        %v1032 = vsub.f32 3.1415927, %v1030
        %v1033 = vsel %vm1031, %v1032, %v1030
        %vm1034 = vcmp.lt.s32.totalorder %v664, 0
        %v1035 = vsel %vm1034, 3.1415927, 0.0
        %vm1036 = vcmp.eq.f32.partialorder %v680, 0.0
        %v1037 = vsel %vm1036, %v1035, %v1033
        %vm1038 = vcmp.ne.f32.partialorder %v664, %v664
        %vm1039 = vcmp.ne.f32.partialorder %v680, %v680
        %vm1040 = vmor %vm1038, %vm1039
        %v1041 = vsel %vm1040, nan, %v1037
        %vm1042 = vcmp.lt.f32.partialorder %v664, 0.0
        %v1043 = vsel %vm1042, 2.3561945, 0.7853982
        %vm1044 = vcmp.eq.s32.totalorder %v991, inf
        %vm1045 = vcmp.eq.s32.totalorder %v992, inf
        %vm1046 = vmand %vm1044, %vm1045
        %v1047 = vsel %vm1046, %v1043, %v1041
        %v1048 = vand.u32 2147483647, %v1047
        %v1049 = vand.u32 %v680, 2147483648
        %v1050 = vor.u32 %v1048, %v1049
        %v1051 = vand.u32 2147483647, %v665
        %v1052 = vand.u32 2147483647, %v681
        %v1053 = vmin.f32 %v1051, %v1052
        %v1054 = vmax.f32 %v1051, %v1052
        %v1055 = vrcp.pop %v1054
        %v1056 = vmul.f32 %v1054, %v1055
        %v1057 = vsub.f32 1.0, %v1056
        %v1058 = vmul.f32 %v1055, %v1057
        %v1059 = vadd.f32 %v1055, %v1058
        %vm1060 = vweird.f32 %v1054
        %vm1061 = vweird.f32 %v1055
        %vm1062 = vmor %vm1060, %vm1061
        %v1063 = vsel %vm1062, %v1055, %v1059
        %v1064 = vand.u32 2147483647, %v1054
        %vm1065 = vcmp.eq.f32.partialorder %v1064, 8.507059e+37
        %v1066 = vand.u32 %v1054, 2147483648
        %v1067 = vor.u32 1.1754944e-38, %v1066
        %v1068 = vsel %vm1065, %v1067, %v1063
        %v1069 = vmul.f32 %v1053, %v1068
        %v1070 = vmul.f32 %v1069, %v1069
        %v1071 = vmul.f32 0.002785687, %v1070
        %v1072 = vadd.f32 %v1071, -0.015866
        %v1073 = vmul.f32 %v1072, %v1070
        %v1074 = vadd.f32 %v1073, 0.04247222
        %v1075 = vmul.f32 %v1074, %v1070
        %v1076 = vadd.f32 %v1075, -0.074975304
        %v1077 = vmul.f32 %v1076, %v1070
        %v1078 = vadd.f32 %v1077, 0.1064488
        %v1079 = vmul.f32 %v1078, %v1070
        %v1080 = vadd.f32 %v1079, -0.14207031
        %v1081 = vmul.f32 %v1080, %v1070
        %v1082 = vadd.f32 %v1081, 0.19993454
        %v1083 = vmul.f32 %v1082, %v1070
        %v1084 = vadd.f32 %v1083, -0.33333147
        %v1085 = vmul.f32 %v1084, %v1070
        %v1086 = vmul.f32 %v1085, %v1069
        %v1087 = vadd.f32 %v1086, %v1069
        %vm1088 = vcmp.gt.f32.partialorder %v1052, %v1051
        %v1089 = vsub.f32 1.5707964, %v1087
        %v1090 = vsel %vm1088, %v1089, %v1087
        %vm1091 = vcmp.lt.f32.partialorder %v665, 0.0
        %v1092 = vsub.f32 3.1415927, %v1090
        %v1093 = vsel %vm1091, %v1092, %v1090
        %vm1094 = vcmp.lt.s32.totalorder %v665, 0
        %v1095 = vsel %vm1094, 3.1415927, 0.0
        %vm1096 = vcmp.eq.f32.partialorder %v681, 0.0
        %v1097 = vsel %vm1096, %v1095, %v1093
        %vm1098 = vcmp.ne.f32.partialorder %v665, %v665
        %vm1099 = vcmp.ne.f32.partialorder %v681, %v681
        %vm1100 = vmor %vm1098, %vm1099
        %v1101 = vsel %vm1100, nan, %v1097
        %vm1102 = vcmp.lt.f32.partialorder %v665, 0.0
        %v1103 = vsel %vm1102, 2.3561945, 0.7853982
        %vm1104 = vcmp.eq.s32.totalorder %v1051, inf
        %vm1105 = vcmp.eq.s32.totalorder %v1052, inf
        %vm1106 = vmand %vm1104, %vm1105
        %v1107 = vsel %vm1106, %v1103, %v1101
        %v1108 = vand.u32 2147483647, %v1107
        %v1109 = vand.u32 %v681, 2147483648
        %v1110 = vor.u32 %v1108, %v1109
        %v1111 = vand.u32 2147483647, %v666
        %v1112 = vand.u32 2147483647, %v682
        %v1113 = vmin.f32 %v1111, %v1112
        %v1114 = vmax.f32 %v1111, %v1112
        %v1115 = vrcp.pop %v1114
        %v1116 = vmul.f32 %v1114, %v1115
        %v1117 = vsub.f32 1.0, %v1116
        %v1118 = vmul.f32 %v1115, %v1117
        %v1119 = vadd.f32 %v1115, %v1118
        %vm1120 = vweird.f32 %v1114
        %vm1121 = vweird.f32 %v1115
        %vm1122 = vmor %vm1120, %vm1121
        %v1123 = vsel %vm1122, %v1115, %v1119
        %v1124 = vand.u32 2147483647, %v1114
        %vm1125 = vcmp.eq.f32.partialorder %v1124, 8.507059e+37
        %v1126 = vand.u32 %v1114, 2147483648
        %v1127 = vor.u32 1.1754944e-38, %v1126
        %v1128 = vsel %vm1125, %v1127, %v1123
        %v1129 = vmul.f32 %v1113, %v1128
        %v1130 = vmul.f32 %v1129, %v1129
        %v1131 = vmul.f32 0.002785687, %v1130
        %v1132 = vadd.f32 %v1131, -0.015866
        %v1133 = vmul.f32 %v1132, %v1130
        %v1134 = vadd.f32 %v1133, 0.04247222
        %v1135 = vmul.f32 %v1134, %v1130
        %v1136 = vadd.f32 %v1135, -0.074975304
        %v1137 = vmul.f32 %v1136, %v1130
        %v1138 = vadd.f32 %v1137, 0.1064488
        %v1139 = vmul.f32 %v1138, %v1130
        %v1140 = vadd.f32 %v1139, -0.14207031
        %v1141 = vmul.f32 %v1140, %v1130
        %v1142 = vadd.f32 %v1141, 0.19993454
        %v1143 = vmul.f32 %v1142, %v1130
        %v1144 = vadd.f32 %v1143, -0.33333147
        %v1145 = vmul.f32 %v1144, %v1130
        %v1146 = vmul.f32 %v1145, %v1129
        %v1147 = vadd.f32 %v1146, %v1129
        %vm1148 = vcmp.gt.f32.partialorder %v1112, %v1111
        %v1149 = vsub.f32 1.5707964, %v1147
        %v1150 = vsel %vm1148, %v1149, %v1147
        %vm1151 = vcmp.lt.f32.partialorder %v666, 0.0
        %v1152 = vsub.f32 3.1415927, %v1150
        %v1153 = vsel %vm1151, %v1152, %v1150
        %vm1154 = vcmp.lt.s32.totalorder %v666, 0
        %v1155 = vsel %vm1154, 3.1415927, 0.0
        %vm1156 = vcmp.eq.f32.partialorder %v682, 0.0
        %v1157 = vsel %vm1156, %v1155, %v1153
        %vm1158 = vcmp.ne.f32.partialorder %v666, %v666
        %vm1159 = vcmp.ne.f32.partialorder %v682, %v682
        %vm1160 = vmor %vm1158, %vm1159
        %v1161 = vsel %vm1160, nan, %v1157
        %vm1162 = vcmp.lt.f32.partialorder %v666, 0.0
        %v1163 = vsel %vm1162, 2.3561945, 0.7853982
        %vm1164 = vcmp.eq.s32.totalorder %v1111, inf
        %vm1165 = vcmp.eq.s32.totalorder %v1112, inf
        %vm1166 = vmand %vm1164, %vm1165
        %v1167 = vsel %vm1166, %v1163, %v1161
        %v1168 = vand.u32 2147483647, %v1167
        %v1169 = vand.u32 %v682, 2147483648
        %v1170 = vor.u32 %v1168, %v1169
        %v1171 = vand.u32 2147483647, %v667
        %v1172 = vand.u32 2147483647, %v683
        %v1173 = vmin.f32 %v1171, %v1172
        %v1174 = vmax.f32 %v1171, %v1172
        %v1175 = vrcp.pop %v1174
        %v1176 = vmul.f32 %v1174, %v1175
        %v1177 = vsub.f32 1.0, %v1176
        %v1178 = vmul.f32 %v1175, %v1177
        %v1179 = vadd.f32 %v1175, %v1178
        %vm1180 = vweird.f32 %v1174
        %vm1181 = vweird.f32 %v1175
        %vm1182 = vmor %vm1180, %vm1181
        %v1183 = vsel %vm1182, %v1175, %v1179
        %v1184 = vand.u32 2147483647, %v1174
        %vm1185 = vcmp.eq.f32.partialorder %v1184, 8.507059e+37
        %v1186 = vand.u32 %v1174, 2147483648
        %v1187 = vor.u32 1.1754944e-38, %v1186
        %v1188 = vsel %vm1185, %v1187, %v1183
        %v1189 = vmul.f32 %v1173, %v1188
        %v1190 = vmul.f32 %v1189, %v1189
        %v1191 = vmul.f32 0.002785687, %v1190
        %v1192 = vadd.f32 %v1191, -0.015866
        %v1193 = vmul.f32 %v1192, %v1190
        %v1194 = vadd.f32 %v1193, 0.04247222
        %v1195 = vmul.f32 %v1194, %v1190
        %v1196 = vadd.f32 %v1195, -0.074975304
        %v1197 = vmul.f32 %v1196, %v1190
        %v1198 = vadd.f32 %v1197, 0.1064488
        %v1199 = vmul.f32 %v1198, %v1190
        %v1200 = vadd.f32 %v1199, -0.14207031
        %v1201 = vmul.f32 %v1200, %v1190
        %v1202 = vadd.f32 %v1201, 0.19993454
        %v1203 = vmul.f32 %v1202, %v1190
        %v1204 = vadd.f32 %v1203, -0.33333147
        %v1205 = vmul.f32 %v1204, %v1190
        %v1206 = vmul.f32 %v1205, %v1189
        %v1207 = vadd.f32 %v1206, %v1189
        %vm1208 = vcmp.gt.f32.partialorder %v1172, %v1171
        %v1209 = vsub.f32 1.5707964, %v1207
        %v1210 = vsel %vm1208, %v1209, %v1207
        %vm1211 = vcmp.lt.f32.partialorder %v667, 0.0
        %v1212 = vsub.f32 3.1415927, %v1210
        %v1213 = vsel %vm1211, %v1212, %v1210
        %vm1214 = vcmp.lt.s32.totalorder %v667, 0
        %v1215 = vsel %vm1214, 3.1415927, 0.0
        %vm1216 = vcmp.eq.f32.partialorder %v683, 0.0
        %v1217 = vsel %vm1216, %v1215, %v1213
        %vm1218 = vcmp.ne.f32.partialorder %v667, %v667
        %vm1219 = vcmp.ne.f32.partialorder %v683, %v683
        %vm1220 = vmor %vm1218, %vm1219
        %v1221 = vsel %vm1220, nan, %v1217
        %vm1222 = vcmp.lt.f32.partialorder %v667, 0.0
        %v1223 = vsel %vm1222, 2.3561945, 0.7853982
        %vm1224 = vcmp.eq.s32.totalorder %v1171, inf
        %vm1225 = vcmp.eq.s32.totalorder %v1172, inf
        %vm1226 = vmand %vm1224, %vm1225
        %v1227 = vsel %vm1226, %v1223, %v1221
        %v1228 = vand.u32 2147483647, %v1227
        %v1229 = vand.u32 %v683, 2147483648
        %v1230 = vor.u32 %v1228, %v1229
        %v1231 = vand.u32 2147483647, %v668
        %v1232 = vand.u32 2147483647, %v684
        %v1233 = vmin.f32 %v1231, %v1232
        %v1234 = vmax.f32 %v1231, %v1232
        %v1235 = vrcp.pop %v1234
        %v1236 = vmul.f32 %v1234, %v1235
        %v1237 = vsub.f32 1.0, %v1236
        %v1238 = vmul.f32 %v1235, %v1237
        %v1239 = vadd.f32 %v1235, %v1238
        %vm1240 = vweird.f32 %v1234
        %vm1241 = vweird.f32 %v1235
        %vm1242 = vmor %vm1240, %vm1241
        %v1243 = vsel %vm1242, %v1235, %v1239
        %v1244 = vand.u32 2147483647, %v1234
        %vm1245 = vcmp.eq.f32.partialorder %v1244, 8.507059e+37
        %v1246 = vand.u32 %v1234, 2147483648
        %v1247 = vor.u32 1.1754944e-38, %v1246
        %v1248 = vsel %vm1245, %v1247, %v1243
        %v1249 = vmul.f32 %v1233, %v1248
        %v1250 = vmul.f32 %v1249, %v1249
        %v1251 = vmul.f32 0.002785687, %v1250
        %v1252 = vadd.f32 %v1251, -0.015866
        %v1253 = vmul.f32 %v1252, %v1250
        %v1254 = vadd.f32 %v1253, 0.04247222
        %v1255 = vmul.f32 %v1254, %v1250
        %v1256 = vadd.f32 %v1255, -0.074975304
        %v1257 = vmul.f32 %v1256, %v1250
        %v1258 = vadd.f32 %v1257, 0.1064488
        %v1259 = vmul.f32 %v1258, %v1250
        %v1260 = vadd.f32 %v1259, -0.14207031
        %v1261 = vmul.f32 %v1260, %v1250
        %v1262 = vadd.f32 %v1261, 0.19993454
        %v1263 = vmul.f32 %v1262, %v1250
        %v1264 = vadd.f32 %v1263, -0.33333147
        %v1265 = vmul.f32 %v1264, %v1250
        %v1266 = vmul.f32 %v1265, %v1249
        %v1267 = vadd.f32 %v1266, %v1249
        %vm1268 = vcmp.gt.f32.partialorder %v1232, %v1231
        %v1269 = vsub.f32 1.5707964, %v1267
        %v1270 = vsel %vm1268, %v1269, %v1267
        %vm1271 = vcmp.lt.f32.partialorder %v668, 0.0
        %v1272 = vsub.f32 3.1415927, %v1270
        %v1273 = vsel %vm1271, %v1272, %v1270
        %vm1274 = vcmp.lt.s32.totalorder %v668, 0
        %v1275 = vsel %vm1274, 3.1415927, 0.0
        %vm1276 = vcmp.eq.f32.partialorder %v684, 0.0
        %v1277 = vsel %vm1276, %v1275, %v1273
        %vm1278 = vcmp.ne.f32.partialorder %v668, %v668
        %vm1279 = vcmp.ne.f32.partialorder %v684, %v684
        %vm1280 = vmor %vm1278, %vm1279
        %v1281 = vsel %vm1280, nan, %v1277
        %vm1282 = vcmp.lt.f32.partialorder %v668, 0.0
        %v1283 = vsel %vm1282, 2.3561945, 0.7853982
        %vm1284 = vcmp.eq.s32.totalorder %v1231, inf
        %vm1285 = vcmp.eq.s32.totalorder %v1232, inf
        %vm1286 = vmand %vm1284, %vm1285
        %v1287 = vsel %vm1286, %v1283, %v1281
        %v1288 = vand.u32 2147483647, %v1287
        %v1289 = vand.u32 %v684, 2147483648
        %v1290 = vor.u32 %v1288, %v1289
        %v1291 = vand.u32 2147483647, %v669
        %v1292 = vand.u32 2147483647, %v685
        %v1293 = vmin.f32 %v1291, %v1292
        %v1294 = vmax.f32 %v1291, %v1292
        %v1295 = vrcp.pop %v1294
        %v1296 = vmul.f32 %v1294, %v1295
        %v1297 = vsub.f32 1.0, %v1296
        %v1298 = vmul.f32 %v1295, %v1297
        %v1299 = vadd.f32 %v1295, %v1298
        %vm1300 = vweird.f32 %v1294
        %vm1301 = vweird.f32 %v1295
        %vm1302 = vmor %vm1300, %vm1301
        %v1303 = vsel %vm1302, %v1295, %v1299
        %v1304 = vand.u32 2147483647, %v1294
        %vm1305 = vcmp.eq.f32.partialorder %v1304, 8.507059e+37
        %v1306 = vand.u32 %v1294, 2147483648
        %v1307 = vor.u32 1.1754944e-38, %v1306
        %v1308 = vsel %vm1305, %v1307, %v1303
        %v1309 = vmul.f32 %v1293, %v1308
        %v1310 = vmul.f32 %v1309, %v1309
        %v1311 = vmul.f32 0.002785687, %v1310
        %v1312 = vadd.f32 %v1311, -0.015866
        %v1313 = vmul.f32 %v1312, %v1310
        %v1314 = vadd.f32 %v1313, 0.04247222
        %v1315 = vmul.f32 %v1314, %v1310
        %v1316 = vadd.f32 %v1315, -0.074975304
        %v1317 = vmul.f32 %v1316, %v1310
        %v1318 = vadd.f32 %v1317, 0.1064488
        %v1319 = vmul.f32 %v1318, %v1310
        %v1320 = vadd.f32 %v1319, -0.14207031
        %v1321 = vmul.f32 %v1320, %v1310
        %v1322 = vadd.f32 %v1321, 0.19993454
        %v1323 = vmul.f32 %v1322, %v1310
        %v1324 = vadd.f32 %v1323, -0.33333147
        %v1325 = vmul.f32 %v1324, %v1310
        %v1326 = vmul.f32 %v1325, %v1309
        %v1327 = vadd.f32 %v1326, %v1309
        %vm1328 = vcmp.gt.f32.partialorder %v1292, %v1291
        %v1329 = vsub.f32 1.5707964, %v1327
        %v1330 = vsel %vm1328, %v1329, %v1327
        %vm1331 = vcmp.lt.f32.partialorder %v669, 0.0
        %v1332 = vsub.f32 3.1415927, %v1330
        %v1333 = vsel %vm1331, %v1332, %v1330
        %vm1334 = vcmp.lt.s32.totalorder %v669, 0
        %v1335 = vsel %vm1334, 3.1415927, 0.0
        %vm1336 = vcmp.eq.f32.partialorder %v685, 0.0
        %v1337 = vsel %vm1336, %v1335, %v1333
        %vm1338 = vcmp.ne.f32.partialorder %v669, %v669
        %vm1339 = vcmp.ne.f32.partialorder %v685, %v685
        %vm1340 = vmor %vm1338, %vm1339
        %v1341 = vsel %vm1340, nan, %v1337
        %vm1342 = vcmp.lt.f32.partialorder %v669, 0.0
        %v1343 = vsel %vm1342, 2.3561945, 0.7853982
        %vm1344 = vcmp.eq.s32.totalorder %v1291, inf
        %vm1345 = vcmp.eq.s32.totalorder %v1292, inf
        %vm1346 = vmand %vm1344, %vm1345
        %v1347 = vsel %vm1346, %v1343, %v1341
        %v1348 = vand.u32 2147483647, %v1347
        %v1349 = vand.u32 %v685, 2147483648
        %v1350 = vor.u32 %v1348, %v1349
        %v1351 = vand.u32 2147483647, %v670
        %v1352 = vand.u32 2147483647, %v686
        %v1353 = vmin.f32 %v1351, %v1352
        %v1354 = vmax.f32 %v1351, %v1352
        %v1355 = vrcp.pop %v1354
        %v1356 = vmul.f32 %v1354, %v1355
        %v1357 = vsub.f32 1.0, %v1356
        %v1358 = vmul.f32 %v1355, %v1357
        %v1359 = vadd.f32 %v1355, %v1358
        %vm1360 = vweird.f32 %v1354
        %vm1361 = vweird.f32 %v1355
        %vm1362 = vmor %vm1360, %vm1361
        %v1363 = vsel %vm1362, %v1355, %v1359
        %v1364 = vand.u32 2147483647, %v1354
        %vm1365 = vcmp.eq.f32.partialorder %v1364, 8.507059e+37
        %v1366 = vand.u32 %v1354, 2147483648
        %v1367 = vor.u32 1.1754944e-38, %v1366
        %v1368 = vsel %vm1365, %v1367, %v1363
        %v1369 = vmul.f32 %v1353, %v1368
        %v1370 = vmul.f32 %v1369, %v1369
        %v1371 = vmul.f32 0.002785687, %v1370
        %v1372 = vadd.f32 %v1371, -0.015866
        %v1373 = vmul.f32 %v1372, %v1370
        %v1374 = vadd.f32 %v1373, 0.04247222
        %v1375 = vmul.f32 %v1374, %v1370
        %v1376 = vadd.f32 %v1375, -0.074975304
        %v1377 = vmul.f32 %v1376, %v1370
        %v1378 = vadd.f32 %v1377, 0.1064488
        %v1379 = vmul.f32 %v1378, %v1370
        %v1380 = vadd.f32 %v1379, -0.14207031
        %v1381 = vmul.f32 %v1380, %v1370
        %v1382 = vadd.f32 %v1381, 0.19993454
        %v1383 = vmul.f32 %v1382, %v1370
        %v1384 = vadd.f32 %v1383, -0.33333147
        %v1385 = vmul.f32 %v1384, %v1370
        %v1386 = vmul.f32 %v1385, %v1369
        %v1387 = vadd.f32 %v1386, %v1369
        %vm1388 = vcmp.gt.f32.partialorder %v1352, %v1351
        %v1389 = vsub.f32 1.5707964, %v1387
        %v1390 = vsel %vm1388, %v1389, %v1387
        %vm1391 = vcmp.lt.f32.partialorder %v670, 0.0
        %v1392 = vsub.f32 3.1415927, %v1390
        %v1393 = vsel %vm1391, %v1392, %v1390
        %vm1394 = vcmp.lt.s32.totalorder %v670, 0
        %v1395 = vsel %vm1394, 3.1415927, 0.0
        %vm1396 = vcmp.eq.f32.partialorder %v686, 0.0
        %v1397 = vsel %vm1396, %v1395, %v1393
        %vm1398 = vcmp.ne.f32.partialorder %v670, %v670
        %vm1399 = vcmp.ne.f32.partialorder %v686, %v686
        %vm1400 = vmor %vm1398, %vm1399
        %v1401 = vsel %vm1400, nan, %v1397
        %vm1402 = vcmp.lt.f32.partialorder %v670, 0.0
        %v1403 = vsel %vm1402, 2.3561945, 0.7853982
        %vm1404 = vcmp.eq.s32.totalorder %v1351, inf
        %vm1405 = vcmp.eq.s32.totalorder %v1352, inf
        %vm1406 = vmand %vm1404, %vm1405
        %v1407 = vsel %vm1406, %v1403, %v1401
        %v1408 = vand.u32 2147483647, %v1407
        %v1409 = vand.u32 %v686, 2147483648
        %v1410 = vor.u32 %v1408, %v1409
        %v1411 = vand.u32 2147483647, %v671
        %v1412 = vand.u32 2147483647, %v687
        %v1413 = vmin.f32 %v1411, %v1412
        %v1414 = vmax.f32 %v1411, %v1412
        %v1415 = vrcp.pop %v1414
        %v1416 = vmul.f32 %v1414, %v1415
        %v1417 = vsub.f32 1.0, %v1416
        %v1418 = vmul.f32 %v1415, %v1417
        %v1419 = vadd.f32 %v1415, %v1418
        %vm1420 = vweird.f32 %v1414
        %vm1421 = vweird.f32 %v1415
        %vm1422 = vmor %vm1420, %vm1421
        %v1423 = vsel %vm1422, %v1415, %v1419
        %v1424 = vand.u32 2147483647, %v1414
        %vm1425 = vcmp.eq.f32.partialorder %v1424, 8.507059e+37
        %v1426 = vand.u32 %v1414, 2147483648
        %v1427 = vor.u32 1.1754944e-38, %v1426
        %v1428 = vsel %vm1425, %v1427, %v1423
        %v1429 = vmul.f32 %v1413, %v1428
        %v1430 = vmul.f32 %v1429, %v1429
        %v1431 = vmul.f32 0.002785687, %v1430
        %v1432 = vadd.f32 %v1431, -0.015866
        %v1433 = vmul.f32 %v1432, %v1430
        %v1434 = vadd.f32 %v1433, 0.04247222
        %v1435 = vmul.f32 %v1434, %v1430
        %v1436 = vadd.f32 %v1435, -0.074975304
        %v1437 = vmul.f32 %v1436, %v1430
        %v1438 = vadd.f32 %v1437, 0.1064488
        %v1439 = vmul.f32 %v1438, %v1430
        %v1440 = vadd.f32 %v1439, -0.14207031
        %v1441 = vmul.f32 %v1440, %v1430
        %v1442 = vadd.f32 %v1441, 0.19993454
        %v1443 = vmul.f32 %v1442, %v1430
        %v1444 = vadd.f32 %v1443, -0.33333147
        %v1445 = vmul.f32 %v1444, %v1430
        %v1446 = vmul.f32 %v1445, %v1429
        %v1447 = vadd.f32 %v1446, %v1429
        %vm1448 = vcmp.gt.f32.partialorder %v1412, %v1411
        %v1449 = vsub.f32 1.5707964, %v1447
        %v1450 = vsel %vm1448, %v1449, %v1447
        %vm1451 = vcmp.lt.f32.partialorder %v671, 0.0
        %v1452 = vsub.f32 3.1415927, %v1450
        %v1453 = vsel %vm1451, %v1452, %v1450
        %vm1454 = vcmp.lt.s32.totalorder %v671, 0
        %v1455 = vsel %vm1454, 3.1415927, 0.0
        %vm1456 = vcmp.eq.f32.partialorder %v687, 0.0
        %v1457 = vsel %vm1456, %v1455, %v1453
        %vm1458 = vcmp.ne.f32.partialorder %v671, %v671
        %vm1459 = vcmp.ne.f32.partialorder %v687, %v687
        %vm1460 = vmor %vm1458, %vm1459
        %v1461 = vsel %vm1460, nan, %v1457
        %vm1462 = vcmp.lt.f32.partialorder %v671, 0.0
        %v1463 = vsel %vm1462, 2.3561945, 0.7853982
        %vm1464 = vcmp.eq.s32.totalorder %v1411, inf
        %vm1465 = vcmp.eq.s32.totalorder %v1412, inf
        %vm1466 = vmand %vm1464, %vm1465
        %v1467 = vsel %vm1466, %v1463, %v1461
        %v1468 = vand.u32 2147483647, %v1467
        %v1469 = vand.u32 %v687, 2147483648
        %v1470 = vor.u32 %v1468, %v1469
        %v1471 = vand.u32 2147483647, %v672
        %v1472 = vand.u32 2147483647, %v688
        %v1473 = vmin.f32 %v1471, %v1472
        %v1474 = vmax.f32 %v1471, %v1472
        %v1475 = vrcp.pop %v1474
        %v1476 = vmul.f32 %v1474, %v1475
        %v1477 = vsub.f32 1.0, %v1476
        %v1478 = vmul.f32 %v1475, %v1477
        %v1479 = vadd.f32 %v1475, %v1478
        %vm1480 = vweird.f32 %v1474
        %vm1481 = vweird.f32 %v1475
        %vm1482 = vmor %vm1480, %vm1481
        %v1483 = vsel %vm1482, %v1475, %v1479
        %v1484 = vand.u32 2147483647, %v1474
        %vm1485 = vcmp.eq.f32.partialorder %v1484, 8.507059e+37
        %v1486 = vand.u32 %v1474, 2147483648
        %v1487 = vor.u32 1.1754944e-38, %v1486
        %v1488 = vsel %vm1485, %v1487, %v1483
        %v1489 = vmul.f32 %v1473, %v1488
        %v1490 = vmul.f32 %v1489, %v1489
        %v1491 = vmul.f32 0.002785687, %v1490
        %v1492 = vadd.f32 %v1491, -0.015866
        %v1493 = vmul.f32 %v1492, %v1490
        %v1494 = vadd.f32 %v1493, 0.04247222
        %v1495 = vmul.f32 %v1494, %v1490
        %v1496 = vadd.f32 %v1495, -0.074975304
        %v1497 = vmul.f32 %v1496, %v1490
        %v1498 = vadd.f32 %v1497, 0.1064488
        %v1499 = vmul.f32 %v1498, %v1490
        %v1500 = vadd.f32 %v1499, -0.14207031
        %v1501 = vmul.f32 %v1500, %v1490
        %v1502 = vadd.f32 %v1501, 0.19993454
        %v1503 = vmul.f32 %v1502, %v1490
        %v1504 = vadd.f32 %v1503, -0.33333147
        %v1505 = vmul.f32 %v1504, %v1490
        %v1506 = vmul.f32 %v1505, %v1489
        %v1507 = vadd.f32 %v1506, %v1489
        %vm1508 = vcmp.gt.f32.partialorder %v1472, %v1471
        %v1509 = vsub.f32 1.5707964, %v1507
        %v1510 = vsel %vm1508, %v1509, %v1507
        %vm1511 = vcmp.lt.f32.partialorder %v672, 0.0
        %v1512 = vsub.f32 3.1415927, %v1510
        %v1513 = vsel %vm1511, %v1512, %v1510
        %vm1514 = vcmp.lt.s32.totalorder %v672, 0
        %v1515 = vsel %vm1514, 3.1415927, 0.0
        %vm1516 = vcmp.eq.f32.partialorder %v688, 0.0
        %v1517 = vsel %vm1516, %v1515, %v1513
        %vm1518 = vcmp.ne.f32.partialorder %v672, %v672
        %vm1519 = vcmp.ne.f32.partialorder %v688, %v688
        %vm1520 = vmor %vm1518, %vm1519
        %v1521 = vsel %vm1520, nan, %v1517
        %vm1522 = vcmp.lt.f32.partialorder %v672, 0.0
        %v1523 = vsel %vm1522, 2.3561945, 0.7853982
        %vm1524 = vcmp.eq.s32.totalorder %v1471, inf
        %vm1525 = vcmp.eq.s32.totalorder %v1472, inf
        %vm1526 = vmand %vm1524, %vm1525
        %v1527 = vsel %vm1526, %v1523, %v1521
        %v1528 = vand.u32 2147483647, %v1527
        %v1529 = vand.u32 %v688, 2147483648
        %v1530 = vor.u32 %v1528, %v1529
        %v1531 = vand.u32 2147483647, %v673
        %v1532 = vand.u32 2147483647, %v689
        %v1533 = vmin.f32 %v1531, %v1532
        %v1534 = vmax.f32 %v1531, %v1532
        %v1535 = vrcp.pop %v1534
        %v1536 = vmul.f32 %v1534, %v1535
        %v1537 = vsub.f32 1.0, %v1536
        %v1538 = vmul.f32 %v1535, %v1537
        %v1539 = vadd.f32 %v1535, %v1538
        %vm1540 = vweird.f32 %v1534
        %vm1541 = vweird.f32 %v1535
        %vm1542 = vmor %vm1540, %vm1541
        %v1543 = vsel %vm1542, %v1535, %v1539
        %v1544 = vand.u32 2147483647, %v1534
        %vm1545 = vcmp.eq.f32.partialorder %v1544, 8.507059e+37
        %v1546 = vand.u32 %v1534, 2147483648
        %v1547 = vor.u32 1.1754944e-38, %v1546
        %v1548 = vsel %vm1545, %v1547, %v1543
        %v1549 = vmul.f32 %v1533, %v1548
        %v1550 = vmul.f32 %v1549, %v1549
        %v1551 = vmul.f32 0.002785687, %v1550
        %v1552 = vadd.f32 %v1551, -0.015866
        %v1553 = vmul.f32 %v1552, %v1550
        %v1554 = vadd.f32 %v1553, 0.04247222
        %v1555 = vmul.f32 %v1554, %v1550
        %v1556 = vadd.f32 %v1555, -0.074975304
        %v1557 = vmul.f32 %v1556, %v1550
        %v1558 = vadd.f32 %v1557, 0.1064488
        %v1559 = vmul.f32 %v1558, %v1550
        %v1560 = vadd.f32 %v1559, -0.14207031
        %v1561 = vmul.f32 %v1560, %v1550
        %v1562 = vadd.f32 %v1561, 0.19993454
        %v1563 = vmul.f32 %v1562, %v1550
        %v1564 = vadd.f32 %v1563, -0.33333147
        %v1565 = vmul.f32 %v1564, %v1550
        %v1566 = vmul.f32 %v1565, %v1549
        %v1567 = vadd.f32 %v1566, %v1549
        %vm1568 = vcmp.gt.f32.partialorder %v1532, %v1531
        %v1569 = vsub.f32 1.5707964, %v1567
        %v1570 = vsel %vm1568, %v1569, %v1567
        %vm1571 = vcmp.lt.f32.partialorder %v673, 0.0
        %v1572 = vsub.f32 3.1415927, %v1570
        %v1573 = vsel %vm1571, %v1572, %v1570
        %vm1574 = vcmp.lt.s32.totalorder %v673, 0
        %v1575 = vsel %vm1574, 3.1415927, 0.0
        %vm1576 = vcmp.eq.f32.partialorder %v689, 0.0
        %v1577 = vsel %vm1576, %v1575, %v1573
        %vm1578 = vcmp.ne.f32.partialorder %v673, %v673
        %vm1579 = vcmp.ne.f32.partialorder %v689, %v689
        %vm1580 = vmor %vm1578, %vm1579
        %v1581 = vsel %vm1580, nan, %v1577
        %vm1582 = vcmp.lt.f32.partialorder %v673, 0.0
        %v1583 = vsel %vm1582, 2.3561945, 0.7853982
        %vm1584 = vcmp.eq.s32.totalorder %v1531, inf
        %vm1585 = vcmp.eq.s32.totalorder %v1532, inf
        %vm1586 = vmand %vm1584, %vm1585
        %v1587 = vsel %vm1586, %v1583, %v1581
        %v1588 = vand.u32 2147483647, %v1587
        %v1589 = vand.u32 %v689, 2147483648
        %v1590 = vor.u32 %v1588, %v1589
        %v1591 = vand.u32 2147483647, %v674
        %v1592 = vand.u32 2147483647, %v690
        %v1593 = vmin.f32 %v1591, %v1592
        %v1594 = vmax.f32 %v1591, %v1592
        %v1595 = vrcp.pop %v1594
        %v1596 = vmul.f32 %v1594, %v1595
        %v1597 = vsub.f32 1.0, %v1596
        %v1598 = vmul.f32 %v1595, %v1597
        %v1599 = vadd.f32 %v1595, %v1598
        %vm1600 = vweird.f32 %v1594
        %vm1601 = vweird.f32 %v1595
        %vm1602 = vmor %vm1600, %vm1601
        %v1603 = vsel %vm1602, %v1595, %v1599
        %v1604 = vand.u32 2147483647, %v1594
        %vm1605 = vcmp.eq.f32.partialorder %v1604, 8.507059e+37
        %v1606 = vand.u32 %v1594, 2147483648
        %v1607 = vor.u32 1.1754944e-38, %v1606
        %v1608 = vsel %vm1605, %v1607, %v1603
        %v1609 = vmul.f32 %v1593, %v1608
        %v1610 = vmul.f32 %v1609, %v1609
        %v1611 = vmul.f32 0.002785687, %v1610
        %v1612 = vadd.f32 %v1611, -0.015866
        %v1613 = vmul.f32 %v1612, %v1610
        %v1614 = vadd.f32 %v1613, 0.04247222
        %v1615 = vmul.f32 %v1614, %v1610
        %v1616 = vadd.f32 %v1615, -0.074975304
        %v1617 = vmul.f32 %v1616, %v1610
        %v1618 = vadd.f32 %v1617, 0.1064488
        %v1619 = vmul.f32 %v1618, %v1610
        %v1620 = vadd.f32 %v1619, -0.14207031
        %v1621 = vmul.f32 %v1620, %v1610
        %v1622 = vadd.f32 %v1621, 0.19993454
        %v1623 = vmul.f32 %v1622, %v1610
        %v1624 = vadd.f32 %v1623, -0.33333147
        %v1625 = vmul.f32 %v1624, %v1610
        %v1626 = vmul.f32 %v1625, %v1609
        %v1627 = vadd.f32 %v1626, %v1609
        %vm1628 = vcmp.gt.f32.partialorder %v1592, %v1591
        %v1629 = vsub.f32 1.5707964, %v1627
        %v1630 = vsel %vm1628, %v1629, %v1627
        %vm1631 = vcmp.lt.f32.partialorder %v674, 0.0
        %v1632 = vsub.f32 3.1415927, %v1630
        %v1633 = vsel %vm1631, %v1632, %v1630
        %vm1634 = vcmp.lt.s32.totalorder %v674, 0
        %v1635 = vsel %vm1634, 3.1415927, 0.0
        %vm1636 = vcmp.eq.f32.partialorder %v690, 0.0
        %v1637 = vsel %vm1636, %v1635, %v1633
        %vm1638 = vcmp.ne.f32.partialorder %v674, %v674
        %vm1639 = vcmp.ne.f32.partialorder %v690, %v690
        %vm1640 = vmor %vm1638, %vm1639
        %v1641 = vsel %vm1640, nan, %v1637
        %vm1642 = vcmp.lt.f32.partialorder %v674, 0.0
        %v1643 = vsel %vm1642, 2.3561945, 0.7853982
        %vm1644 = vcmp.eq.s32.totalorder %v1591, inf
        %vm1645 = vcmp.eq.s32.totalorder %v1592, inf
        %vm1646 = vmand %vm1644, %vm1645
        %v1647 = vsel %vm1646, %v1643, %v1641
        %v1648 = vand.u32 2147483647, %v1647
        %v1649 = vand.u32 %v690, 2147483648
        %v1650 = vor.u32 %v1648, %v1649
        %1651 = vst [vmem:[%s350] sm:$0xff] %v750
        %1652 = vst [vmem:[%s350 + $0x8] sm:$0xff] %v810
        %1653 = vst [vmem:[%s350 + $0x10] sm:$0xff] %v870
        %1654 = vst [vmem:[%s350 + $0x18] sm:$0xff] %v930
        %1655 = vst [vmem:[%s350 + $0x20] sm:$0xff] %v990
        %1656 = vst [vmem:[%s350 + $0x28] sm:$0xff] %v1050
        %1657 = vst [vmem:[%s350 + $0x30] sm:$0xff] %v1110
        %1658 = vst [vmem:[%s350 + $0x38] sm:$0xff] %v1170
        %1659 = vst [vmem:[%s350 + $0x40] sm:$0xff] %v1230
        %1660 = vst [vmem:[%s350 + $0x48] sm:$0xff] %v1290
        %1661 = vst [vmem:[%s350 + $0x50] sm:$0xff] %v1350
        %1662 = vst [vmem:[%s350 + $0x58] sm:$0xff] %v1410
        %1663 = vst [vmem:[%s350 + $0x60] sm:$0xff] %v1470
        %1664 = vst [vmem:[%s350 + $0x68] sm:$0xff] %v1530
        %1665 = vst [vmem:[%s350 + $0x70] sm:$0xff] %v1590
        %1666 = vst [vmem:[%s350 + $0x78] sm:$0xff] %v1650
        %v1667 = vmul.f32 %v659, %v659
        %v1668 = vmul.f32 %v660, %v660
        %v1669 = vmul.f32 %v661, %v661
        %v1670 = vmul.f32 %v662, %v662
        %v1671 = vmul.f32 %v663, %v663
        %v1672 = vmul.f32 %v664, %v664
        %v1673 = vmul.f32 %v665, %v665
        %v1674 = vmul.f32 %v666, %v666
        %v1675 = vmul.f32 %v667, %v667
        %v1676 = vmul.f32 %v668, %v668
        %v1677 = vmul.f32 %v669, %v669
        %v1678 = vmul.f32 %v670, %v670
        %v1679 = vmul.f32 %v671, %v671
        %v1680 = vmul.f32 %v672, %v672
        %v1681 = vmul.f32 %v673, %v673
        %v1682 = vmul.f32 %v674, %v674
        %v1683 = vmul.f32 %v675, %v675
        %v1684 = vmul.f32 %v676, %v676
        %v1685 = vmul.f32 %v677, %v677
        %v1686 = vmul.f32 %v678, %v678
        %v1687 = vmul.f32 %v679, %v679
        %v1688 = vmul.f32 %v680, %v680
        %v1689 = vmul.f32 %v681, %v681
        %v1690 = vmul.f32 %v682, %v682
        %v1691 = vmul.f32 %v683, %v683
        %v1692 = vmul.f32 %v684, %v684
        %v1693 = vmul.f32 %v685, %v685
        %v1694 = vmul.f32 %v686, %v686
        %v1695 = vmul.f32 %v687, %v687
        %v1696 = vmul.f32 %v688, %v688
        %v1697 = vmul.f32 %v689, %v689
        %v1698 = vmul.f32 %v690, %v690
        %v1699 = vadd.f32 %v1667, %v1683
        %v1700 = vadd.f32 %v1668, %v1684
        %v1701 = vadd.f32 %v1669, %v1685
        %v1702 = vadd.f32 %v1670, %v1686
        %v1703 = vadd.f32 %v1671, %v1687
        %v1704 = vadd.f32 %v1672, %v1688
        %v1705 = vadd.f32 %v1673, %v1689
        %v1706 = vadd.f32 %v1674, %v1690
        %v1707 = vadd.f32 %v1675, %v1691
        %v1708 = vadd.f32 %v1676, %v1692
        %v1709 = vadd.f32 %v1677, %v1693
        %v1710 = vadd.f32 %v1678, %v1694
        %v1711 = vadd.f32 %v1679, %v1695
        %v1712 = vadd.f32 %v1680, %v1696
        %v1713 = vadd.f32 %v1681, %v1697
        %v1714 = vadd.f32 %v1682, %v1698
        %v1715 = vrsqrt.pop %v1699
        %v1716 = vmul.f32 %v1715, %v1699
        %v1717 = vmul.f32 %v1716, %v1715
        %v1718 = vmul.f32 0.5, %v1717
        %v1719 = vsub.f32 1.5, %v1718
        %v1720 = vmul.f32 %v1715, %v1719
        %v1721 = vmul.f32 %v1699, %v1720
        %vm1722 = vcmp.eq.f32.partialorder %v1699, inf
        %v1723 = vsel %vm1722, %v1699, %v1721
        %vm1724 = vcmp.eq.f32.partialorder %v1699, 0.0
        %v1725 = vand.u32 %v1699, 2147483648
        %v1726 = vsel %vm1724, %v1725, %v1723
        %v1727 = vrsqrt.pop %v1700
        %v1728 = vmul.f32 %v1727, %v1700
        %v1729 = vmul.f32 %v1728, %v1727
        %v1730 = vmul.f32 0.5, %v1729
        %v1731 = vsub.f32 1.5, %v1730
        %v1732 = vmul.f32 %v1727, %v1731
        %v1733 = vmul.f32 %v1700, %v1732
        %vm1734 = vcmp.eq.f32.partialorder %v1700, inf
        %v1735 = vsel %vm1734, %v1700, %v1733
        %vm1736 = vcmp.eq.f32.partialorder %v1700, 0.0
        %v1737 = vand.u32 %v1700, 2147483648
        %v1738 = vsel %vm1736, %v1737, %v1735
        %v1739 = vrsqrt.pop %v1701
        %v1740 = vmul.f32 %v1739, %v1701
        %v1741 = vmul.f32 %v1740, %v1739
        %v1742 = vmul.f32 0.5, %v1741
        %v1743 = vsub.f32 1.5, %v1742
        %v1744 = vmul.f32 %v1739, %v1743
        %v1745 = vmul.f32 %v1701, %v1744
        %vm1746 = vcmp.eq.f32.partialorder %v1701, inf
        %v1747 = vsel %vm1746, %v1701, %v1745
        %vm1748 = vcmp.eq.f32.partialorder %v1701, 0.0
        %v1749 = vand.u32 %v1701, 2147483648
        %v1750 = vsel %vm1748, %v1749, %v1747
        %v1751 = vrsqrt.pop %v1702
        %v1752 = vmul.f32 %v1751, %v1702
        %v1753 = vmul.f32 %v1752, %v1751
        %v1754 = vmul.f32 0.5, %v1753
        %v1755 = vsub.f32 1.5, %v1754
        %v1756 = vmul.f32 %v1751, %v1755
        %v1757 = vmul.f32 %v1702, %v1756
        %vm1758 = vcmp.eq.f32.partialorder %v1702, inf
        %v1759 = vsel %vm1758, %v1702, %v1757
        %vm1760 = vcmp.eq.f32.partialorder %v1702, 0.0
        %v1761 = vand.u32 %v1702, 2147483648
        %v1762 = vsel %vm1760, %v1761, %v1759
        %v1763 = vrsqrt.pop %v1703
        %v1764 = vmul.f32 %v1763, %v1703
        %v1765 = vmul.f32 %v1764, %v1763
        %v1766 = vmul.f32 0.5, %v1765
        %v1767 = vsub.f32 1.5, %v1766
        %v1768 = vmul.f32 %v1763, %v1767
        %v1769 = vmul.f32 %v1703, %v1768
        %vm1770 = vcmp.eq.f32.partialorder %v1703, inf
        %v1771 = vsel %vm1770, %v1703, %v1769
        %vm1772 = vcmp.eq.f32.partialorder %v1703, 0.0
        %v1773 = vand.u32 %v1703, 2147483648
        %v1774 = vsel %vm1772, %v1773, %v1771
        %v1775 = vrsqrt.pop %v1704
        %v1776 = vmul.f32 %v1775, %v1704
        %v1777 = vmul.f32 %v1776, %v1775
        %v1778 = vmul.f32 0.5, %v1777
        %v1779 = vsub.f32 1.5, %v1778
        %v1780 = vmul.f32 %v1775, %v1779
        %v1781 = vmul.f32 %v1704, %v1780
        %vm1782 = vcmp.eq.f32.partialorder %v1704, inf
        %v1783 = vsel %vm1782, %v1704, %v1781
        %vm1784 = vcmp.eq.f32.partialorder %v1704, 0.0
        %v1785 = vand.u32 %v1704, 2147483648
        %v1786 = vsel %vm1784, %v1785, %v1783
        %v1787 = vrsqrt.pop %v1705
        %v1788 = vmul.f32 %v1787, %v1705
        %v1789 = vmul.f32 %v1788, %v1787
        %v1790 = vmul.f32 0.5, %v1789
        %v1791 = vsub.f32 1.5, %v1790
        %v1792 = vmul.f32 %v1787, %v1791
        %v1793 = vmul.f32 %v1705, %v1792
        %vm1794 = vcmp.eq.f32.partialorder %v1705, inf
        %v1795 = vsel %vm1794, %v1705, %v1793
        %vm1796 = vcmp.eq.f32.partialorder %v1705, 0.0
        %v1797 = vand.u32 %v1705, 2147483648
        %v1798 = vsel %vm1796, %v1797, %v1795
        %v1799 = vrsqrt.pop %v1706
        %v1800 = vmul.f32 %v1799, %v1706
        %v1801 = vmul.f32 %v1800, %v1799
        %v1802 = vmul.f32 0.5, %v1801
        %v1803 = vsub.f32 1.5, %v1802
        %v1804 = vmul.f32 %v1799, %v1803
        %v1805 = vmul.f32 %v1706, %v1804
        %vm1806 = vcmp.eq.f32.partialorder %v1706, inf
        %v1807 = vsel %vm1806, %v1706, %v1805
        %vm1808 = vcmp.eq.f32.partialorder %v1706, 0.0
        %v1809 = vand.u32 %v1706, 2147483648
        %v1810 = vsel %vm1808, %v1809, %v1807
        %v1811 = vrsqrt.pop %v1707
        %v1812 = vmul.f32 %v1811, %v1707
        %v1813 = vmul.f32 %v1812, %v1811
        %v1814 = vmul.f32 0.5, %v1813
        %v1815 = vsub.f32 1.5, %v1814
        %v1816 = vmul.f32 %v1811, %v1815
        %v1817 = vmul.f32 %v1707, %v1816
        %vm1818 = vcmp.eq.f32.partialorder %v1707, inf
        %v1819 = vsel %vm1818, %v1707, %v1817
        %vm1820 = vcmp.eq.f32.partialorder %v1707, 0.0
        %v1821 = vand.u32 %v1707, 2147483648
        %v1822 = vsel %vm1820, %v1821, %v1819
        %v1823 = vrsqrt.pop %v1708
        %v1824 = vmul.f32 %v1823, %v1708
        %v1825 = vmul.f32 %v1824, %v1823
        %v1826 = vmul.f32 0.5, %v1825
        %v1827 = vsub.f32 1.5, %v1826
        %v1828 = vmul.f32 %v1823, %v1827
        %v1829 = vmul.f32 %v1708, %v1828
        %vm1830 = vcmp.eq.f32.partialorder %v1708, inf
        %v1831 = vsel %vm1830, %v1708, %v1829
        %vm1832 = vcmp.eq.f32.partialorder %v1708, 0.0
        %v1833 = vand.u32 %v1708, 2147483648
        %v1834 = vsel %vm1832, %v1833, %v1831
        %v1835 = vrsqrt.pop %v1709
        %v1836 = vmul.f32 %v1835, %v1709
        %v1837 = vmul.f32 %v1836, %v1835
        %v1838 = vmul.f32 0.5, %v1837
        %v1839 = vsub.f32 1.5, %v1838
        %v1840 = vmul.f32 %v1835, %v1839
        %v1841 = vmul.f32 %v1709, %v1840
        %vm1842 = vcmp.eq.f32.partialorder %v1709, inf
        %v1843 = vsel %vm1842, %v1709, %v1841
        %vm1844 = vcmp.eq.f32.partialorder %v1709, 0.0
        %v1845 = vand.u32 %v1709, 2147483648
        %v1846 = vsel %vm1844, %v1845, %v1843
        %v1847 = vrsqrt.pop %v1710
        %v1848 = vmul.f32 %v1847, %v1710
        %v1849 = vmul.f32 %v1848, %v1847
        %v1850 = vmul.f32 0.5, %v1849
        %v1851 = vsub.f32 1.5, %v1850
        %v1852 = vmul.f32 %v1847, %v1851
        %v1853 = vmul.f32 %v1710, %v1852
        %vm1854 = vcmp.eq.f32.partialorder %v1710, inf
        %v1855 = vsel %vm1854, %v1710, %v1853
        %vm1856 = vcmp.eq.f32.partialorder %v1710, 0.0
        %v1857 = vand.u32 %v1710, 2147483648
        %v1858 = vsel %vm1856, %v1857, %v1855
        %v1859 = vrsqrt.pop %v1711
        %v1860 = vmul.f32 %v1859, %v1711
        %v1861 = vmul.f32 %v1860, %v1859
        %v1862 = vmul.f32 0.5, %v1861
        %v1863 = vsub.f32 1.5, %v1862
        %v1864 = vmul.f32 %v1859, %v1863
        %v1865 = vmul.f32 %v1711, %v1864
        %vm1866 = vcmp.eq.f32.partialorder %v1711, inf
        %v1867 = vsel %vm1866, %v1711, %v1865
        %vm1868 = vcmp.eq.f32.partialorder %v1711, 0.0
        %v1869 = vand.u32 %v1711, 2147483648
        %v1870 = vsel %vm1868, %v1869, %v1867
        %v1871 = vrsqrt.pop %v1712
        %v1872 = vmul.f32 %v1871, %v1712
        %v1873 = vmul.f32 %v1872, %v1871
        %v1874 = vmul.f32 0.5, %v1873
        %v1875 = vsub.f32 1.5, %v1874
        %v1876 = vmul.f32 %v1871, %v1875
        %v1877 = vmul.f32 %v1712, %v1876
        %vm1878 = vcmp.eq.f32.partialorder %v1712, inf
        %v1879 = vsel %vm1878, %v1712, %v1877
        %vm1880 = vcmp.eq.f32.partialorder %v1712, 0.0
        %v1881 = vand.u32 %v1712, 2147483648
        %v1882 = vsel %vm1880, %v1881, %v1879
        %v1883 = vrsqrt.pop %v1713
        %v1884 = vmul.f32 %v1883, %v1713
        %v1885 = vmul.f32 %v1884, %v1883
        %v1886 = vmul.f32 0.5, %v1885
        %v1887 = vsub.f32 1.5, %v1886
        %v1888 = vmul.f32 %v1883, %v1887
        %v1889 = vmul.f32 %v1713, %v1888
        %vm1890 = vcmp.eq.f32.partialorder %v1713, inf
        %v1891 = vsel %vm1890, %v1713, %v1889
        %vm1892 = vcmp.eq.f32.partialorder %v1713, 0.0
        %v1893 = vand.u32 %v1713, 2147483648
        %v1894 = vsel %vm1892, %v1893, %v1891
        %v1895 = vrsqrt.pop %v1714
        %v1896 = vmul.f32 %v1895, %v1714
        %v1897 = vmul.f32 %v1896, %v1895
        %v1898 = vmul.f32 0.5, %v1897
        %v1899 = vsub.f32 1.5, %v1898
        %v1900 = vmul.f32 %v1895, %v1899
        %v1901 = vmul.f32 %v1714, %v1900
        %vm1902 = vcmp.eq.f32.partialorder %v1714, inf
        %v1903 = vsel %vm1902, %v1714, %v1901
        %vm1904 = vcmp.eq.f32.partialorder %v1714, 0.0
        %v1905 = vand.u32 %v1714, 2147483648
        %v1906 = vsel %vm1904, %v1905, %v1903
        %s1907 = scalar_lea.vmem %s350, 128 [#allocation3]
        %1908 = vst [vmem:[%s1907] sm:$0xff] %v1726
        %1909 = vst [vmem:[%s1907 + $0x8] sm:$0xff] %v1738
        %1910 = vst [vmem:[%s1907 + $0x10] sm:$0xff] %v1750
        %1911 = vst [vmem:[%s1907 + $0x18] sm:$0xff] %v1762
        %1912 = vst [vmem:[%s1907 + $0x20] sm:$0xff] %v1774
        %1913 = vst [vmem:[%s1907 + $0x28] sm:$0xff] %v1786
        %1914 = vst [vmem:[%s1907 + $0x30] sm:$0xff] %v1798
        %1915 = vst [vmem:[%s1907 + $0x38] sm:$0xff] %v1810
        %1916 = vst [vmem:[%s1907 + $0x40] sm:$0xff] %v1822
        %1917 = vst [vmem:[%s1907 + $0x48] sm:$0xff] %v1834
        %1918 = vst [vmem:[%s1907 + $0x50] sm:$0xff] %v1846
        %1919 = vst [vmem:[%s1907 + $0x58] sm:$0xff] %v1858
        %1920 = vst [vmem:[%s1907 + $0x60] sm:$0xff] %v1870
        %1921 = vst [vmem:[%s1907 + $0x68] sm:$0xff] %v1882
        %1922 = vst [vmem:[%s1907 + $0x70] sm:$0xff] %v1894
        %1923 = vst [vmem:[%s1907 + $0x78] sm:$0xff] %v1906
        %s1924 = sand.u32 %s112, 1
        %s1925 = sand.u32 %s112, 1
        %s1926 = smul.addr %s1925, 256
        %s1927 = scalar_lea.vmem [#allocation3], %s1926
        // Predicated region
        $region75: #{range_fourier_net.1} parent=69 // pred_check
          %p1928 = pneg %p122
        $region76: #{range_fourier_net.1} parent=69 // pred_check_branch
          %1930 = sbr.rel (%p1928) target = $region78
        $region77: #{range_fourier_net.1} parent=69 // pred_region
          %s1931 = smul.addr %s15, 8
          %s1932 = scalar_lea.vmem %s4, %s1931
          // Predicated region
          $region79: #{range_fourier_net.1} parent=77 // pred_check
            _
          $region80: #{range_fourier_net.1} parent=77 // pred_check_branch
            %1934 = sbr.rel (0) target = $region82
          $region81: #{range_fourier_net.1} parent=77 // pred_region
            // Predicated region
            $region83: #{range_fourier_net.1} parent=81 // pred_check
              _
            $region84: #{range_fourier_net.1} parent=81 // pred_check_branch
              %1936 = sbr.rel (0) target = $region86
            $region85: #{range_fourier_net.1} parent=81 // pred_region
              // Predicated region
              $region98: #{range_fourier_net.1} parent=85 // pred_check
                _
              $region99: #{range_fourier_net.1} parent=85 // pred_check_branch
                %2014 = sbr.rel (0) target = $region101
              $region100: #{range_fourier_net.1} parent=85 // pred_region
                loop: start=0, step=1, limit=1
                $region102: #{range_fourier_net.1} parent=100 // loop_pre_header
                  _
                $region103: #{range_fourier_net.1} parent=100 // loop_header
                  %s2016 = sphi 0, %s2020
                  %p2017 = scmp.ge.s32.totalorder %s2016, 1
                  %s2021 = sphi %s1927, %s1927
                  %s2022 = sphi %s1932, %s1932
                $region104: #{range_fourier_net.1} parent=100 // loop_header_branch
                  %2019 = sbr.rel (%p2017) target = $region108
                $region105: #{range_fourier_net.1} parent=100 // loop_body
                  %v2023 = vld [vmem:[%s2021] sm:$0xff]
                  %2024 = vst [vmem:[%s2022] sm:$0xff] %v2023
                  %v2025 = vld [vmem:[%s2021 + $0x8] sm:$0xff]
                  %2026 = vst [vmem:[%s2022 + $0x10] sm:$0xff] %v2025
                  %v2027 = vld [vmem:[%s2021 + $0x10] sm:$0xff]
                  %2028 = vst [vmem:[%s2022 + $0x20] sm:$0xff] %v2027
                  %v2029 = vld [vmem:[%s2021 + $0x18] sm:$0xff]
                  %2030 = vst [vmem:[%s2022 + $0x30] sm:$0xff] %v2029
                  %v2031 = vld [vmem:[%s2021 + $0x20] sm:$0xff]
                  %2032 = vst [vmem:[%s2022 + $0x40] sm:$0xff] %v2031
                  %v2033 = vld [vmem:[%s2021 + $0x28] sm:$0xff]
                  %2034 = vst [vmem:[%s2022 + $0x50] sm:$0xff] %v2033
                  %v2035 = vld [vmem:[%s2021 + $0x30] sm:$0xff]
                  %2036 = vst [vmem:[%s2022 + $0x60] sm:$0xff] %v2035
                  %v2037 = vld [vmem:[%s2021 + $0x38] sm:$0xff]
                  %2038 = vst [vmem:[%s2022 + $0x70] sm:$0xff] %v2037
                  %v2039 = vld [vmem:[%s2021 + $0x40] sm:$0xff]
                  %2040 = vst [vmem:[%s2022 + $0x80] sm:$0xff] %v2039
                  %v2041 = vld [vmem:[%s2021 + $0x48] sm:$0xff]
                  %2042 = vst [vmem:[%s2022 + $0x90] sm:$0xff] %v2041
                  %v2043 = vld [vmem:[%s2021 + $0x50] sm:$0xff]
                  %2044 = vst [vmem:[%s2022 + $0xa0] sm:$0xff] %v2043
                  %v2045 = vld [vmem:[%s2021 + $0x58] sm:$0xff]
                  %2046 = vst [vmem:[%s2022 + $0xb0] sm:$0xff] %v2045
                  %v2047 = vld [vmem:[%s2021 + $0x60] sm:$0xff]
                  %2048 = vst [vmem:[%s2022 + $0xc0] sm:$0xff] %v2047
                  %v2049 = vld [vmem:[%s2021 + $0x68] sm:$0xff]
                  %2050 = vst [vmem:[%s2022 + $0xd0] sm:$0xff] %v2049
                  %v2051 = vld [vmem:[%s2021 + $0x70] sm:$0xff]
                  %2052 = vst [vmem:[%s2022 + $0xe0] sm:$0xff] %v2051
                  %v2053 = vld [vmem:[%s2021 + $0x78] sm:$0xff]
                  %2054 = vst [vmem:[%s2022 + $0xf0] sm:$0xff] %v2053
                  %v2055 = vld [vmem:[%s2021 + $0x80] sm:$0xff]
                  %2056 = vst [vmem:[%s2022 + $0x100] sm:$0xff] %v2055
                  %v2057 = vld [vmem:[%s2021 + $0x88] sm:$0xff]
                  %2058 = vst [vmem:[%s2022 + $0x110] sm:$0xff] %v2057
                  %v2059 = vld [vmem:[%s2021 + $0x90] sm:$0xff]
                  %2060 = vst [vmem:[%s2022 + $0x120] sm:$0xff] %v2059
                  %v2061 = vld [vmem:[%s2021 + $0x98] sm:$0xff]
                  %2062 = vst [vmem:[%s2022 + $0x130] sm:$0xff] %v2061
                  %v2063 = vld [vmem:[%s2021 + $0xa0] sm:$0xff]
                  %2064 = vst [vmem:[%s2022 + $0x140] sm:$0xff] %v2063
                  %v2065 = vld [vmem:[%s2021 + $0xa8] sm:$0xff]
                  %2066 = vst [vmem:[%s2022 + $0x150] sm:$0xff] %v2065
                  %v2067 = vld [vmem:[%s2021 + $0xb0] sm:$0xff]
                  %2068 = vst [vmem:[%s2022 + $0x160] sm:$0xff] %v2067
                  %v2069 = vld [vmem:[%s2021 + $0xb8] sm:$0xff]
                  %2070 = vst [vmem:[%s2022 + $0x170] sm:$0xff] %v2069
                  %v2071 = vld [vmem:[%s2021 + $0xc0] sm:$0xff]
                  %2072 = vst [vmem:[%s2022 + $0x180] sm:$0xff] %v2071
                  %v2073 = vld [vmem:[%s2021 + $0xc8] sm:$0xff]
                  %2074 = vst [vmem:[%s2022 + $0x190] sm:$0xff] %v2073
                  %v2075 = vld [vmem:[%s2021 + $0xd0] sm:$0xff]
                  %2076 = vst [vmem:[%s2022 + $0x1a0] sm:$0xff] %v2075
                  %v2077 = vld [vmem:[%s2021 + $0xd8] sm:$0xff]
                  %2078 = vst [vmem:[%s2022 + $0x1b0] sm:$0xff] %v2077
                  %v2079 = vld [vmem:[%s2021 + $0xe0] sm:$0xff]
                  %2080 = vst [vmem:[%s2022 + $0x1c0] sm:$0xff] %v2079
                  %v2081 = vld [vmem:[%s2021 + $0xe8] sm:$0xff]
                  %2082 = vst [vmem:[%s2022 + $0x1d0] sm:$0xff] %v2081
                  %v2083 = vld [vmem:[%s2021 + $0xf0] sm:$0xff]
                  %2084 = vst [vmem:[%s2022 + $0x1e0] sm:$0xff] %v2083
                  %v2085 = vld [vmem:[%s2021 + $0xf8] sm:$0xff]
                  %2086 = vst [vmem:[%s2022 + $0x1f0] sm:$0xff] %v2085
                $region106: #{range_fourier_net.1} parent=100 // loop_footer
                  %s2020 = sadd.s32 1, %s2016
                $region107: #{range_fourier_net.1} parent=100 // loop_footer_branch
                  %2015 = sbr.rel target = $region103
                $region108: #{range_fourier_net.1} parent=100 // loop_exit
                  _
              $region101: #{range_fourier_net.1} parent=85 // pred_fallthru
                _
              // Predicated region
              $region109: #{range_fourier_net.1} parent=85 // pred_check
                _
              $region110: #{range_fourier_net.1} parent=85 // pred_check_branch
                %2088 = sbr.rel target = $region112
              $region111: #{range_fourier_net.1} parent=85 // pred_region
                _
              $region112: #{range_fourier_net.1} parent=85 // pred_fallthru
                _
            $region86: #{range_fourier_net.1} parent=81 // pred_fallthru
              _
            // Predicated region
            $region87: #{range_fourier_net.1} parent=81 // pred_check
              _
            $region88: #{range_fourier_net.1} parent=81 // pred_check_branch
              %1938 = sbr.rel target = $region90
            $region89: #{range_fourier_net.1} parent=81 // pred_region
              %s1940 = ssub.s32 256, 1
              loop: start=0, step=1, limit=1
              $region91: #{range_fourier_net.1} parent=89 // loop_pre_header
                _
              $region92: #{range_fourier_net.1} parent=89 // loop_header
                %s1942 = sphi 0, %s1946
                %p1943 = scmp.ge.s32.totalorder %s1942, 1
                %s1947 = sphi %s1927, %s1927
                %s1948 = sphi %s1932, %s1932
              $region93: #{range_fourier_net.1} parent=89 // loop_header_branch
                %1945 = sbr.rel (%p1943) target = $region97
              $region94: #{range_fourier_net.1} parent=89 // loop_body
                %v1949 = vld [vmem:[%s1947] sm:%s1940]
                %1950 = vst [vmem:[%s1948] sm:%s1940] %v1949
                %v1951 = vld [vmem:[%s1947 + $0x8] sm:%s1940]
                %1952 = vst [vmem:[%s1948 + $0x10] sm:%s1940] %v1951
                %v1953 = vld [vmem:[%s1947 + $0x10] sm:%s1940]
                %1954 = vst [vmem:[%s1948 + $0x20] sm:%s1940] %v1953
                %v1955 = vld [vmem:[%s1947 + $0x18] sm:%s1940]
                %1956 = vst [vmem:[%s1948 + $0x30] sm:%s1940] %v1955
                %v1957 = vld [vmem:[%s1947 + $0x20] sm:%s1940]
                %1958 = vst [vmem:[%s1948 + $0x40] sm:%s1940] %v1957
                %v1959 = vld [vmem:[%s1947 + $0x28] sm:%s1940]
                %1960 = vst [vmem:[%s1948 + $0x50] sm:%s1940] %v1959
                %v1961 = vld [vmem:[%s1947 + $0x30] sm:%s1940]
                %1962 = vst [vmem:[%s1948 + $0x60] sm:%s1940] %v1961
                %v1963 = vld [vmem:[%s1947 + $0x38] sm:%s1940]
                %1964 = vst [vmem:[%s1948 + $0x70] sm:%s1940] %v1963
                %v1965 = vld [vmem:[%s1947 + $0x40] sm:%s1940]
                %1966 = vst [vmem:[%s1948 + $0x80] sm:%s1940] %v1965
                %v1967 = vld [vmem:[%s1947 + $0x48] sm:%s1940]
                %1968 = vst [vmem:[%s1948 + $0x90] sm:%s1940] %v1967
                %v1969 = vld [vmem:[%s1947 + $0x50] sm:%s1940]
                %1970 = vst [vmem:[%s1948 + $0xa0] sm:%s1940] %v1969
                %v1971 = vld [vmem:[%s1947 + $0x58] sm:%s1940]
                %1972 = vst [vmem:[%s1948 + $0xb0] sm:%s1940] %v1971
                %v1973 = vld [vmem:[%s1947 + $0x60] sm:%s1940]
                %1974 = vst [vmem:[%s1948 + $0xc0] sm:%s1940] %v1973
                %v1975 = vld [vmem:[%s1947 + $0x68] sm:%s1940]
                %1976 = vst [vmem:[%s1948 + $0xd0] sm:%s1940] %v1975
                %v1977 = vld [vmem:[%s1947 + $0x70] sm:%s1940]
                %1978 = vst [vmem:[%s1948 + $0xe0] sm:%s1940] %v1977
                %v1979 = vld [vmem:[%s1947 + $0x78] sm:%s1940]
                %1980 = vst [vmem:[%s1948 + $0xf0] sm:%s1940] %v1979
                %v1981 = vld [vmem:[%s1947 + $0x80] sm:%s1940]
                %1982 = vst [vmem:[%s1948 + $0x100] sm:%s1940] %v1981
                %v1983 = vld [vmem:[%s1947 + $0x88] sm:%s1940]
                %1984 = vst [vmem:[%s1948 + $0x110] sm:%s1940] %v1983
                %v1985 = vld [vmem:[%s1947 + $0x90] sm:%s1940]
                %1986 = vst [vmem:[%s1948 + $0x120] sm:%s1940] %v1985
                %v1987 = vld [vmem:[%s1947 + $0x98] sm:%s1940]
                %1988 = vst [vmem:[%s1948 + $0x130] sm:%s1940] %v1987
                %v1989 = vld [vmem:[%s1947 + $0xa0] sm:%s1940]
                %1990 = vst [vmem:[%s1948 + $0x140] sm:%s1940] %v1989
                %v1991 = vld [vmem:[%s1947 + $0xa8] sm:%s1940]
                %1992 = vst [vmem:[%s1948 + $0x150] sm:%s1940] %v1991
                %v1993 = vld [vmem:[%s1947 + $0xb0] sm:%s1940]
                %1994 = vst [vmem:[%s1948 + $0x160] sm:%s1940] %v1993
                %v1995 = vld [vmem:[%s1947 + $0xb8] sm:%s1940]
                %1996 = vst [vmem:[%s1948 + $0x170] sm:%s1940] %v1995
                %v1997 = vld [vmem:[%s1947 + $0xc0] sm:%s1940]
                %1998 = vst [vmem:[%s1948 + $0x180] sm:%s1940] %v1997
                %v1999 = vld [vmem:[%s1947 + $0xc8] sm:%s1940]
                %2000 = vst [vmem:[%s1948 + $0x190] sm:%s1940] %v1999
                %v2001 = vld [vmem:[%s1947 + $0xd0] sm:%s1940]
                %2002 = vst [vmem:[%s1948 + $0x1a0] sm:%s1940] %v2001
                %v2003 = vld [vmem:[%s1947 + $0xd8] sm:%s1940]
                %2004 = vst [vmem:[%s1948 + $0x1b0] sm:%s1940] %v2003
                %v2005 = vld [vmem:[%s1947 + $0xe0] sm:%s1940]
                %2006 = vst [vmem:[%s1948 + $0x1c0] sm:%s1940] %v2005
                %v2007 = vld [vmem:[%s1947 + $0xe8] sm:%s1940]
                %2008 = vst [vmem:[%s1948 + $0x1d0] sm:%s1940] %v2007
                %v2009 = vld [vmem:[%s1947 + $0xf0] sm:%s1940]
                %2010 = vst [vmem:[%s1948 + $0x1e0] sm:%s1940] %v2009
                %v2011 = vld [vmem:[%s1947 + $0xf8] sm:%s1940]
                %2012 = vst [vmem:[%s1948 + $0x1f0] sm:%s1940] %v2011
              $region95: #{range_fourier_net.1} parent=89 // loop_footer
                %s1946 = sadd.s32 1, %s1942
              $region96: #{range_fourier_net.1} parent=89 // loop_footer_branch
                %1941 = sbr.rel target = $region92
              $region97: #{range_fourier_net.1} parent=89 // loop_exit
                _
            $region90: #{range_fourier_net.1} parent=81 // pred_fallthru
              _
          $region82: #{range_fourier_net.1} parent=77 // pred_fallthru
            _
          %2089 = vnop
        $region78: #{range_fourier_net.1} parent=69 // pred_fallthru
          _
      $region70: #{range_fourier_net.1} parent=5 // pred_fallthru
        _
      %p2090 = scmp.le.s32.totalorder 2, %s10
      // Predicated region
      $region113: #{range_fourier_net.1} parent=5 // pred_check
        %p2091 = pneg %p2090
      $region114: #{range_fourier_net.1} parent=5 // pred_check_branch
        %2093 = sbr.rel (%p2091) target = $region116
      $region115: #{range_fourier_net.1} parent=5 // pred_region
        %s2094 = ssub.s32 %s10, 2
        // Predicated region
        $region117: #{range_fourier_net.1} parent=115 // pred_check
          %p2095 = pneg %p128
        $region118: #{range_fourier_net.1} parent=115 // pred_check_branch
          %2097 = sbr.rel (%p2095) target = $region120
        $region119: #{range_fourier_net.1} parent=115 // pred_region
          %s2098 = sand.u32 %s113, 1
          %s2099 = sand.u32 %s113, 1
          %s2100 = smul.addr %s2099, 256
          %s2101 = scalar_lea.vmem [#allocation3], %s2100
        $region120: #{range_fourier_net.1} parent=115 // pred_fallthru
          _
      $region116: #{range_fourier_net.1} parent=5 // pred_fallthru
        _
    $region6: #{range_fourier_net.1} parent=1 // loop_footer
      %s14 = sadd.s32 1, %s10
    $region7: #{range_fourier_net.1} parent=1 // loop_footer_branch
      %9 = sbr.rel target = $region3
    $region8: #{range_fourier_net.1} parent=1 // loop_exit
      _

</llo_original>
